<compile_context>
chip_gen: v7x
topology: tpu7x:2x2x1
jax: 0.10.0
libtpu: 0.0.40
codegen_flags: <defaults>
</compile_context>

<pallas_src>
import numpy as np
import jax
import jax.numpy as jnp
from jax import lax
from jax.experimental import pallas as pl
from jax.experimental.pallas import tpu as pltpu

K = 3          # conv kernel size (module arg)
C_HID = 128    # conv1 out channels
DK = 2         # deconv kernel size == stride == pool size


def _mxu_dot_bf16x3(a, b):
    """f32 matmul via 3 native bf16 MXU passes (== lax.Precision.HIGH)."""
    a_hi = a.astype(jnp.bfloat16)
    b_hi = b.astype(jnp.bfloat16)
    a_lo = (a - a_hi.astype(jnp.float32)).astype(jnp.bfloat16)
    b_lo = (b - b_hi.astype(jnp.float32)).astype(jnp.bfloat16)
    acc = jnp.dot(a_hi, b_hi, preferred_element_type=jnp.float32)
    acc = acc + jnp.dot(a_hi, b_lo, preferred_element_type=jnp.float32)
    acc = acc + jnp.dot(a_lo, b_hi, preferred_element_type=jnp.float32)
    return acc


def _make_kernel(nw: int, NB: int, NWP: int):
    S = NB * NWP                      # lanes per (sample-batch) block
    shifts = []
    t = 1
    while t < NWP:                    # NWP is a power of two
        shifts.append(t)
        t *= 2

    def kernel(pp_ref, w1_ref, wd_ref, db_ref, out_ref):
        pats = pp_ref[0]                                        # [kk, 4*S]
        # conv1: single fused MXU matmul over all pool positions & samples.
        c = _mxu_dot_bf16x3(w1_ref[...], pats)                  # [128, 4*S]
        # fused 2x2 max-pool: max over the 4 pool-position lane groups
        # (slices at multiples of S are whole-vreg selections).
        pooled = jnp.maximum(
            jnp.maximum(c[:, 0 * S:1 * S], c[:, 1 * S:2 * S]),
            jnp.maximum(c[:, 2 * S:3 * S], c[:, 3 * S:4 * S]))  # [128, S]
        # deconv (stride == kernel => per-pooled-pixel matmul); the x5 scale,
        # conv bias and deconv bias are all folded into wd / db in the glue.
        d = _mxu_dot_bf16x3(wd_ref[...], pooled) + db_ref[...]  # [4, S]
        # mask pad lanes (pooled-pixel index >= nw) to the product identity.
        lane = lax.broadcasted_iota(jnp.int32, (DK * DK, S), 1)
        d = jnp.where(jnp.bitwise_and(lane, NWP - 1) < nw, d, 1.0)
        # product over the 4 deconv taps (sublanes)...
        q = d[0:1] * d[1:2] * d[2:3] * d[3:4]                   # [1, S]
        # ...then per-sample product over each NWP-lane block with a cyclic
        # multiplicative roll tree (XLU slot, overlaps MXU). After the tree
        # every lane of a block holds the full block product, so the final
        # write is one unmasked lane-dense store.
        outs = []
        for n in range(NB):
            v = q[:, n * NWP:(n + 1) * NWP]                     # [1, NWP]
            for s in shifts:
                v = v * pltpu.roll(v, s, axis=1)
            outs.append(v)
        out_ref[0] = jnp.concatenate(outs, axis=1)              # [1, S]

    return kernel


def single_cnn_forward(x, params, samples_per_step: int = 8):
    """x: [bs, 1, H, W] float32 (NCHW like the PyTorch module). Returns [bs]."""
    w1, b1, wd, bd = params          # [128,1,3,3], [128], [128,1,2,2], [1]
    bs, cin, H, W = x.shape
    assert cin == 1
    Ho, Wo = H - K + 1, W - K + 1
    assert Ho % 2 == 0 and Wo % 2 == 0
    Hp, Wp = Ho // 2, Wo // 2
    nw, kk = Hp * Wp, K * K

    NWP = max(128, int(pl.next_power_of_2(nw)))   # pooled pixels per lane block
    assert NWP & (NWP - 1) == 0
    NB = min(bs, samples_per_step)                # samples per grid step
    G = pl.cdiv(bs, NB)                           # grid steps
    S = NB * NWP

    # --- glue: im2col + (pool-pos, sample, pooled-pixel) lane layout ---
    xs = x[:, 0]                                                  # [bs, H, W]
    cols = [xs[:, di:di + Ho, dj:dj + Wo] for di in range(K) for dj in range(K)]
    patches = jnp.stack(cols, axis=-1)                            # [bs,Ho,Wo,kk]
    pp = patches.reshape(bs, Hp, 2, Wp, 2, kk)                    # [b,wi,p,wj,q,c]
    pp = pp.transpose(5, 2, 4, 0, 1, 3)                           # [c,p,q,b,wi,wj]
    pp = pp.reshape(kk, DK * DK, bs, nw)
    pp = jnp.pad(pp, ((0, 0), (0, 0), (0, G * NB - bs), (0, NWP - nw)))
    pp = pp.reshape(kk, DK * DK, G, NB, NWP).transpose(2, 0, 1, 3, 4)
    A = pp.reshape(G, kk, DK * DK * S)            # lane index = k*S + n*NWP + w

    # Weights: fold the x5 scale and BOTH biases (conv + deconv) into the
    # deconv weight / a per-tap bias column, so the kernel is matmul+max only.
    w1m = w1.reshape(C_HID, kk)                                   # [128, 9]
    wdm = wd.reshape(C_HID, DK * DK).T * 5.0                      # [4, 128]
    dbias = (jnp.dot(wdm, b1.reshape(C_HID, 1),
                     precision=lax.Precision.HIGHEST)
             + 5.0 * bd[0]).astype(jnp.float32)                   # [4, 1]

    out = pl.pallas_call(
        _make_kernel(nw, NB, NWP),
        out_shape=jax.ShapeDtypeStruct((G, 1, S), jnp.float32),
        grid_spec=pltpu.PrefetchScalarGridSpec(
            num_scalar_prefetch=0,
            grid=(G,),
            in_specs=[
                pl.BlockSpec((1, kk, DK * DK * S), lambda g: (g, 0, 0)),
                pl.BlockSpec((C_HID, kk), lambda g: (0, 0)),
                pl.BlockSpec((DK * DK, C_HID), lambda g: (0, 0)),
                pl.BlockSpec((DK * DK, 1), lambda g: (0, 0)),
            ],
            out_specs=pl.BlockSpec((1, 1, S), lambda g: (g, 0, 0)),
        ),
        # per-step output blocks -> batch axis can shard across v7x's 2 TCs
        compiler_params=pltpu.CompilerParams(
            dimension_semantics=("parallel",)),
    )(A, w1m, wdm, dbias)

    # Every lane of a sample's 128-lane block holds its product; take lane 0.
    return out.reshape(G * NB, NWP)[:bs, 0]


def reference(x, w1, b1, wd, bd):
    """Pure-JAX reference mirroring the PyTorch forward."""
    y = lax.conv_general_dilated(
        x, w1, window_strides=(1, 1), padding='VALID',
        dimension_numbers=('NCHW', 'OIHW', 'NCHW'),
        precision=lax.Precision.HIGHEST)
    y = y + b1[None, :, None, None]
    y = lax.reduce_window(y, -jnp.inf, lax.max,
                          (1, 1, 2, 2), (1, 1, 2, 2), 'VALID')
    d = jnp.einsum('bchw,copq->bohpwq', y, wd,
                   precision=lax.Precision.HIGHEST)
    bs = x.shape[0]
    Hp, Wp = y.shape[2], y.shape[3]
    d = d.reshape(bs, 1, Hp * 2, Wp * 2) + bd[0]
    d = d.reshape(bs, -1) * 5.0
    return jnp.prod(d, axis=1)


if __name__ == "__main__":
    key = jax.random.PRNGKey(0)
    k1, k2, k3, k4 = jax.random.split(key, 4)
    bs, H, W = 2, 16, 16
    x = jax.random.normal(k1, (bs, 1, H, W), jnp.float32)
    # Deterministic synthetic parameters (shapes from the module __init__).
    w1 = jax.random.uniform(k2, (C_HID, 1, K, K), jnp.float32, -0.25, 0.25)
    b1 = jax.random.uniform(k3, (C_HID,), jnp.float32, -0.1, 0.1)
    wd = jax.random.uniform(k4, (C_HID, 1, DK, DK), jnp.float32, -0.01, 0.01)
    bd = jnp.array([0.2], jnp.float32)
    params = (w1, b1, wd, bd)

    out = single_cnn_forward(x, params)
    out = jax.block_until_ready(out)

    ref = reference(x, w1, b1, wd, bd)
    np.testing.assert_allclose(np.asarray(out), np.asarray(ref),
                               rtol=1e-2, atol=1e-6)
    print("KERNEL_OK")
</pallas_src>

<mosaic_0001>
module attributes {stable_mosaic.version = 11 : i64} {
  func.func @kernel(%arg0: i32, %arg1: memref<1x9x1024xf32, #tpu.memory_space<vmem>>, %arg2: memref<128x9xf32, #tpu.memory_space<vmem>>, %arg3: memref<4x128xf32, #tpu.memory_space<vmem>>, %arg4: memref<4x1xf32, #tpu.memory_space<vmem>>, %arg5: memref<1x1x256xf32, #tpu.memory_space<vmem>>) attributes {dimension_semantics = [#tpu.dimension_semantics<parallel>], iteration_bounds = array<i64: 1>, scalar_prefetch = 0 : i64, scratch_operands = 0 : i64, tpu.core_type = #tpu.core_type<tc>, window_params = [{transform_indices = @transform_0, window_bounds = array<i64: 1, 9, 1024>}, {pipeline_mode = #tpu.pipeline_mode<synchronous>, transform_indices = @transform_1, window_bounds = array<i64: 128, 9>}, {pipeline_mode = #tpu.pipeline_mode<synchronous>, transform_indices = @transform_2, window_bounds = array<i64: 4, 128>}, {pipeline_mode = #tpu.pipeline_mode<synchronous>, transform_indices = @transform_3, window_bounds = array<i64: 4, 1>}, {transform_indices = @transform_4, window_bounds = array<i64: 1, 1, 256>}]} {
    %c0 = arith.constant 0 : index
    %c0_0 = arith.constant 0 : index
    %c0_1 = arith.constant 0 : index
    %0 = vector.load %arg1[%c0, %c0_0, %c0_1] : memref<1x9x1024xf32, #tpu.memory_space<vmem>>, vector<1x9x1024xf32>
    %1 = vector.shape_cast %0 : vector<1x9x1024xf32> to vector<9x1024xf32>
    %c0_2 = arith.constant 0 : index
    %c0_3 = arith.constant 0 : index
    %2 = vector.load %arg2[%c0_2, %c0_3] : memref<128x9xf32, #tpu.memory_space<vmem>>, vector<128x9xf32>
    %3 = arith.truncf %2 : vector<128x9xf32> to vector<128x9xbf16>
    %4 = arith.truncf %1 : vector<9x1024xf32> to vector<9x1024xbf16>
    %5 = arith.extf %3 : vector<128x9xbf16> to vector<128x9xf32>
    %6 = arith.subf %2, %5 : vector<128x9xf32>
    %7 = arith.truncf %6 : vector<128x9xf32> to vector<128x9xbf16>
    %8 = arith.extf %4 : vector<9x1024xbf16> to vector<9x1024xf32>
    %9 = arith.subf %1, %8 : vector<9x1024xf32>
    %10 = arith.truncf %9 : vector<9x1024xf32> to vector<9x1024xbf16>
    %cst = arith.constant dense<0.000000e+00> : vector<128x1024xf32>
    %11 = tpu.matmul %3, %4, %cst {dimension_numbers = #tpu.dot_dimension_numbers<[1], [0], [0], [1], [0, 0, 1, 1], [], []>} : vector<128x9xbf16>, vector<9x1024xbf16>, vector<128x1024xf32> -> vector<128x1024xf32>
    %cst_4 = arith.constant dense<0.000000e+00> : vector<128x1024xf32>
    %12 = tpu.matmul %3, %10, %cst_4 {dimension_numbers = #tpu.dot_dimension_numbers<[1], [0], [0], [1], [0, 0, 1, 1], [], []>} : vector<128x9xbf16>, vector<9x1024xbf16>, vector<128x1024xf32> -> vector<128x1024xf32>
    %13 = arith.addf %11, %12 : vector<128x1024xf32>
    %cst_5 = arith.constant dense<0.000000e+00> : vector<128x1024xf32>
    %14 = tpu.matmul %7, %4, %cst_5 {dimension_numbers = #tpu.dot_dimension_numbers<[1], [0], [0], [1], [0, 0, 1, 1], [], []>} : vector<128x9xbf16>, vector<9x1024xbf16>, vector<128x1024xf32> -> vector<128x1024xf32>
    %15 = arith.addf %13, %14 : vector<128x1024xf32>
    %16 = vector.extract_strided_slice %15 {offsets = [0, 0], sizes = [128, 256], strides = [1, 1]} : vector<128x1024xf32> to vector<128x256xf32>
    %17 = vector.extract_strided_slice %15 {offsets = [0, 256], sizes = [128, 256], strides = [1, 1]} : vector<128x1024xf32> to vector<128x256xf32>
    %18 = arith.maximumf %16, %17 : vector<128x256xf32>
    %19 = vector.extract_strided_slice %15 {offsets = [0, 512], sizes = [128, 256], strides = [1, 1]} : vector<128x1024xf32> to vector<128x256xf32>
    %20 = vector.extract_strided_slice %15 {offsets = [0, 768], sizes = [128, 256], strides = [1, 1]} : vector<128x1024xf32> to vector<128x256xf32>
    %21 = arith.maximumf %19, %20 : vector<128x256xf32>
    %22 = arith.maximumf %18, %21 : vector<128x256xf32>
    %c0_6 = arith.constant 0 : index
    %c0_7 = arith.constant 0 : index
    %23 = vector.load %arg3[%c0_6, %c0_7] : memref<4x128xf32, #tpu.memory_space<vmem>>, vector<4x128xf32>
    %24 = arith.truncf %23 : vector<4x128xf32> to vector<4x128xbf16>
    %25 = arith.truncf %22 : vector<128x256xf32> to vector<128x256xbf16>
    %26 = arith.extf %24 : vector<4x128xbf16> to vector<4x128xf32>
    %27 = arith.subf %23, %26 : vector<4x128xf32>
    %28 = arith.truncf %27 : vector<4x128xf32> to vector<4x128xbf16>
    %29 = arith.extf %25 : vector<128x256xbf16> to vector<128x256xf32>
    %30 = arith.subf %22, %29 : vector<128x256xf32>
    %31 = arith.truncf %30 : vector<128x256xf32> to vector<128x256xbf16>
    %cst_8 = arith.constant dense<0.000000e+00> : vector<4x256xf32>
    %32 = tpu.matmul %24, %25, %cst_8 {dimension_numbers = #tpu.dot_dimension_numbers<[1], [0], [0], [1], [0, 0, 1, 1], [], []>} : vector<4x128xbf16>, vector<128x256xbf16>, vector<4x256xf32> -> vector<4x256xf32>
    %cst_9 = arith.constant dense<0.000000e+00> : vector<4x256xf32>
    %33 = tpu.matmul %24, %31, %cst_9 {dimension_numbers = #tpu.dot_dimension_numbers<[1], [0], [0], [1], [0, 0, 1, 1], [], []>} : vector<4x128xbf16>, vector<128x256xbf16>, vector<4x256xf32> -> vector<4x256xf32>
    %34 = arith.addf %32, %33 : vector<4x256xf32>
    %cst_10 = arith.constant dense<0.000000e+00> : vector<4x256xf32>
    %35 = tpu.matmul %28, %25, %cst_10 {dimension_numbers = #tpu.dot_dimension_numbers<[1], [0], [0], [1], [0, 0, 1, 1], [], []>} : vector<4x128xbf16>, vector<128x256xbf16>, vector<4x256xf32> -> vector<4x256xf32>
    %36 = arith.addf %34, %35 : vector<4x256xf32>
    %c0_11 = arith.constant 0 : index
    %c0_12 = arith.constant 0 : index
    %37 = vector.load %arg4[%c0_11, %c0_12] : memref<4x1xf32, #tpu.memory_space<vmem>>, vector<4x1xf32>
    %38 = vector.broadcast %37 : vector<4x1xf32> to vector<4x256xf32>
    %39 = arith.addf %36, %38 : vector<4x256xf32>
    %40 = tpu.iota {dimensions = array<i32: 1>} : vector<4x256xi32>
    %c127_i32 = arith.constant 127 : i32
    %41 = vector.broadcast %c127_i32 : i32 to vector<4x256xi32>
    %42 = arith.andi %40, %41 : vector<4x256xi32>
    %c49_i32 = arith.constant 49 : i32
    %43 = vector.broadcast %c49_i32 : i32 to vector<4x256xi32>
    %44 = arith.cmpi slt, %42, %43 : vector<4x256xi32>
    %cst_13 = arith.constant 1.000000e+00 : f32
    %45 = vector.broadcast %cst_13 : f32 to vector<4x256xf32>
    %46 = arith.select %44, %39, %45 : vector<4x256xi1>, vector<4x256xf32>
    %47 = vector.extract_strided_slice %46 {offsets = [0, 0], sizes = [1, 256], strides = [1, 1]} : vector<4x256xf32> to vector<1x256xf32>
    %48 = vector.extract_strided_slice %46 {offsets = [1, 0], sizes = [1, 256], strides = [1, 1]} : vector<4x256xf32> to vector<1x256xf32>
    %49 = arith.mulf %47, %48 : vector<1x256xf32>
    %50 = vector.extract_strided_slice %46 {offsets = [2, 0], sizes = [1, 256], strides = [1, 1]} : vector<4x256xf32> to vector<1x256xf32>
    %51 = arith.mulf %49, %50 : vector<1x256xf32>
    %52 = vector.extract_strided_slice %46 {offsets = [3, 0], sizes = [1, 256], strides = [1, 1]} : vector<4x256xf32> to vector<1x256xf32>
    %53 = arith.mulf %51, %52 : vector<1x256xf32>
    %54 = vector.extract_strided_slice %53 {offsets = [0, 0], sizes = [1, 128], strides = [1, 1]} : vector<1x256xf32> to vector<1x128xf32>
    %c1_i32 = arith.constant 1 : i32
    %55 = tpu.dynamic_rotate %54 by %c1_i32 dim 1 : vector<1x128xf32>, i32 -> vector<1x128xf32>
    %56 = arith.mulf %54, %55 : vector<1x128xf32>
    %c2_i32 = arith.constant 2 : i32
    %57 = tpu.dynamic_rotate %56 by %c2_i32 dim 1 : vector<1x128xf32>, i32 -> vector<1x128xf32>
    %58 = arith.mulf %56, %57 : vector<1x128xf32>
    %c4_i32 = arith.constant 4 : i32
    %59 = tpu.dynamic_rotate %58 by %c4_i32 dim 1 : vector<1x128xf32>, i32 -> vector<1x128xf32>
    %60 = arith.mulf %58, %59 : vector<1x128xf32>
    %c8_i32 = arith.constant 8 : i32
    %61 = tpu.dynamic_rotate %60 by %c8_i32 dim 1 : vector<1x128xf32>, i32 -> vector<1x128xf32>
    %62 = arith.mulf %60, %61 : vector<1x128xf32>
    %c16_i32 = arith.constant 16 : i32
    %63 = tpu.dynamic_rotate %62 by %c16_i32 dim 1 : vector<1x128xf32>, i32 -> vector<1x128xf32>
    %64 = arith.mulf %62, %63 : vector<1x128xf32>
    %c32_i32 = arith.constant 32 : i32
    %65 = tpu.dynamic_rotate %64 by %c32_i32 dim 1 : vector<1x128xf32>, i32 -> vector<1x128xf32>
    %66 = arith.mulf %64, %65 : vector<1x128xf32>
    %c64_i32 = arith.constant 64 : i32
    %67 = tpu.dynamic_rotate %66 by %c64_i32 dim 1 : vector<1x128xf32>, i32 -> vector<1x128xf32>
    %68 = arith.mulf %66, %67 : vector<1x128xf32>
    %69 = vector.extract_strided_slice %53 {offsets = [0, 128], sizes = [1, 128], strides = [1, 1]} : vector<1x256xf32> to vector<1x128xf32>
    %c1_i32_14 = arith.constant 1 : i32
    %70 = tpu.dynamic_rotate %69 by %c1_i32_14 dim 1 : vector<1x128xf32>, i32 -> vector<1x128xf32>
    %71 = arith.mulf %69, %70 : vector<1x128xf32>
    %c2_i32_15 = arith.constant 2 : i32
    %72 = tpu.dynamic_rotate %71 by %c2_i32_15 dim 1 : vector<1x128xf32>, i32 -> vector<1x128xf32>
    %73 = arith.mulf %71, %72 : vector<1x128xf32>
    %c4_i32_16 = arith.constant 4 : i32
    %74 = tpu.dynamic_rotate %73 by %c4_i32_16 dim 1 : vector<1x128xf32>, i32 -> vector<1x128xf32>
    %75 = arith.mulf %73, %74 : vector<1x128xf32>
    %c8_i32_17 = arith.constant 8 : i32
    %76 = tpu.dynamic_rotate %75 by %c8_i32_17 dim 1 : vector<1x128xf32>, i32 -> vector<1x128xf32>
    %77 = arith.mulf %75, %76 : vector<1x128xf32>
    %c16_i32_18 = arith.constant 16 : i32
    %78 = tpu.dynamic_rotate %77 by %c16_i32_18 dim 1 : vector<1x128xf32>, i32 -> vector<1x128xf32>
    %79 = arith.mulf %77, %78 : vector<1x128xf32>
    %c32_i32_19 = arith.constant 32 : i32
    %80 = tpu.dynamic_rotate %79 by %c32_i32_19 dim 1 : vector<1x128xf32>, i32 -> vector<1x128xf32>
    %81 = arith.mulf %79, %80 : vector<1x128xf32>
    %c64_i32_20 = arith.constant 64 : i32
    %82 = tpu.dynamic_rotate %81 by %c64_i32_20 dim 1 : vector<1x128xf32>, i32 -> vector<1x128xf32>
    %83 = arith.mulf %81, %82 : vector<1x128xf32>
    %84 = tpu.concatenate %68, %83 in 1 : vector<1x128xf32>, vector<1x128xf32> -> vector<1x256xf32>
    %c0_21 = arith.constant 0 : index
    %c0_22 = arith.constant 0 : index
    %c0_23 = arith.constant 0 : index
    %85 = vector.load %arg5[%c0_21, %c0_22, %c0_23] : memref<1x1x256xf32, #tpu.memory_space<vmem>>, vector<1x1x256xf32>
    %86 = vector.shape_cast %85 : vector<1x1x256xf32> to vector<1x256xf32>
    %87 = vector.shape_cast %84 : vector<1x256xf32> to vector<1x1x256xf32>
    tpu.vector_store %arg5[%c0_21, %c0_22, %c0_23], %87 {strides = array<i32>} : memref<1x1x256xf32, #tpu.memory_space<vmem>>, vector<1x1x256xf32>,
    return
  }
  func.func @transform_0(%arg0: i32) -> (i32, i32, i32) {
    %c0_i32 = arith.constant 0 : i32
    %c0_i32_0 = arith.constant 0 : i32
    %c0_i32_1 = arith.constant 0 : i32
    return %arg0, %c0_i32, %c0_i32_0 : i32, i32, i32
  }
  func.func @transform_1(%arg0: i32) -> (i32, i32) {
    %c0_i32 = arith.constant 0 : i32
    %c0_i32_0 = arith.constant 0 : i32
    %c0_i32_1 = arith.constant 0 : i32
    return %c0_i32, %c0_i32_0 : i32, i32
  }
  func.func @transform_2(%arg0: i32) -> (i32, i32) {
    %c0_i32 = arith.constant 0 : i32
    %c0_i32_0 = arith.constant 0 : i32
    %c0_i32_1 = arith.constant 0 : i32
    return %c0_i32, %c0_i32_0 : i32, i32
  }
  func.func @transform_3(%arg0: i32) -> (i32, i32) {
    %c0_i32 = arith.constant 0 : i32
    %c0_i32_0 = arith.constant 0 : i32
    %c0_i32_1 = arith.constant 0 : i32
    return %c0_i32, %c0_i32_0 : i32, i32
  }
  func.func @transform_4(%arg0: i32) -> (i32, i32, i32) {
    %c0_i32 = arith.constant 0 : i32
    %c0_i32_0 = arith.constant 0 : i32
    %c0_i32_1 = arith.constant 0 : i32
    return %arg0, %c0_i32, %c0_i32_0 : i32, i32, i32
  }
}

</mosaic_0001>

<llo_original>
// kernel: tpu_custom_call.1
$region0: #{tpu_custom_call.1}
  #allocation0 [shape = 'u32[]', space=smem, size = 0x4, offset = 0x4, fixed_abs, tag = 'smem constant byte address 0x4 - core index']
  #allocation1 [shape = 'u32[144,128]{1,0:T(1,128)}', space=vmem, size = 0x12000, scoped, tag = 'internal scratch']
  %s0 = inlined_call_operand.vmem [shape: f32[1,9,1024], index: 0, kind: input, shape index: {}]
  %s1 = inlined_call_operand.vmem [shape: f32[128,9], index: 1, kind: input, shape index: {}]
  %s2 = inlined_call_operand.vmem [shape: f32[4,128], index: 2, kind: input, shape index: {}]
  %s3 = inlined_call_operand.vmem [shape: f32[4,1], index: 3, kind: input, shape index: {}]
  %s4 = inlined_call_operand.hbm [shape: f32[1,1,256], index: 4, kind: output, shape index: {}]
  %s5 = sld [smem:[#allocation0]]
  $region26: #{tpu_custom_call.1} parent=0
    _
  %s7 = ssub.s32 1, %s5
  %s8 = scalar_select 0, %s7, %s5
  $region1: #{tpu_custom_call.1} parent=0
    #allocation2 [shape = 'u8[1024]{0}', space=vmem, size = 0x400, scoped, tag = 'output window, operand 0, single buffered']
    #allocation3 [shape = 's32[1]{0}', space=sflag, size = 0x4, scoped, tag = 'scoped memory for tpu_custom_call.1']
    %9 = vsyncpa [#allocation3], 0
    // Predicated region
    $region2: #{tpu_custom_call.1} parent=1 // pred_check
      _
    $region3: #{tpu_custom_call.1} parent=1 // pred_check_branch
      %11 = sbr.rel (0) target = $region5
    $region4: #{tpu_custom_call.1} parent=1 // pred_region
      _
    $region5: #{tpu_custom_call.1} parent=1 // pred_fallthru
      _
    // Predicated region
    $region6: #{tpu_custom_call.1} parent=1 // pred_check
      _
    $region7: #{tpu_custom_call.1} parent=1 // pred_check_branch
      %13 = sbr.rel (0) target = $region9
    $region8: #{tpu_custom_call.1} parent=1 // pred_region
      _
    $region9: #{tpu_custom_call.1} parent=1 // pred_fallthru
      _
    // Predicated region
    $region10: #{tpu_custom_call.1} parent=1 // pred_check
      _
    $region11: #{tpu_custom_call.1} parent=1 // pred_check_branch
      %15 = sbr.rel (0) target = $region13
    $region12: #{tpu_custom_call.1} parent=1 // pred_region
      _
    $region13: #{tpu_custom_call.1} parent=1 // pred_fallthru
      _
    // Predicated region
    $region14: #{tpu_custom_call.1} parent=1 // pred_check
      _
    $region15: #{tpu_custom_call.1} parent=1 // pred_check_branch
      %17 = sbr.rel (0) target = $region17
    $region16: #{tpu_custom_call.1} parent=1 // pred_region
      _
    $region17: #{tpu_custom_call.1} parent=1 // pred_fallthru
      _
    %v19 = vld [vmem:[%s0] sm:$0xff]
    %v20 = vld [vmem:[%s0 + $0x8] sm:$0xff]
    %v21 = vld [vmem:[%s0 + $0x10] sm:$0xff]
    %v22 = vld [vmem:[%s0 + $0x18] sm:$0xff]
    %v23 = vld [vmem:[%s0 + $0x20] sm:$0xff]
    %v24 = vld [vmem:[%s0 + $0x28] sm:$0xff]
    %v25 = vld [vmem:[%s0 + $0x30] sm:$0xff]
    %v26 = vld [vmem:[%s0 + $0x38] sm:$0xff]
    %v27 = vld [vmem:[%s0 + $0x40] sm:$0x1]
    %v28 = vld [vmem:[%s0 + $0x48] sm:$0x1]
    %v29 = vld [vmem:[%s0 + $0x50] sm:$0x1]
    %v30 = vld [vmem:[%s0 + $0x58] sm:$0x1]
    %v31 = vld [vmem:[%s0 + $0x60] sm:$0x1]
    %v32 = vld [vmem:[%s0 + $0x68] sm:$0x1]
    %v33 = vld [vmem:[%s0 + $0x70] sm:$0x1]
    %v34 = vld [vmem:[%s0 + $0x78] sm:$0x1]
    %v35 = vld [vmem:[%s1] sm:$0xff]
    %v36 = vld [vmem:[%s1 + $0x8] sm:$0xff]
    %v37 = vld [vmem:[%s1 + $0x10] sm:$0xff]
    %v38 = vld [vmem:[%s1 + $0x18] sm:$0xff]
    %v39 = vld [vmem:[%s1 + $0x20] sm:$0xff]
    %v40 = vld [vmem:[%s1 + $0x28] sm:$0xff]
    %v41 = vld [vmem:[%s1 + $0x30] sm:$0xff]
    %v42 = vld [vmem:[%s1 + $0x38] sm:$0xff]
    %v43 = vld [vmem:[%s1 + $0x40] sm:$0xff]
    %v44 = vld [vmem:[%s1 + $0x48] sm:$0xff]
    %v45 = vld [vmem:[%s1 + $0x50] sm:$0xff]
    %v46 = vld [vmem:[%s1 + $0x58] sm:$0xff]
    %v47 = vld [vmem:[%s1 + $0x60] sm:$0xff]
    %v48 = vld [vmem:[%s1 + $0x68] sm:$0xff]
    %v49 = vld [vmem:[%s1 + $0x70] sm:$0xff]
    %v50 = vld [vmem:[%s1 + $0x78] sm:$0xff]
    %v51 = vpack.c.bf16 %v36, %v35
    %v52 = vpack.c.bf16 %v38, %v37
    %v53 = vpack.c.bf16 %v40, %v39
    %v54 = vpack.c.bf16 %v42, %v41
    %v55 = vpack.c.bf16 %v44, %v43
    %v56 = vpack.c.bf16 %v46, %v45
    %v57 = vpack.c.bf16 %v48, %v47
    %v58 = vpack.c.bf16 %v50, %v49
    %v59 = vpack.c.bf16 %v27, %v19
    %v60 = vpack.c.bf16 %v28, %v20
    %v61 = vpack.c.bf16 %v29, %v21
    %v62 = vpack.c.bf16 %v30, %v22
    %v63 = vpack.c.bf16 %v31, %v23
    %v64 = vpack.c.bf16 %v32, %v24
    %v65 = vpack.c.bf16 %v33, %v25
    %v66 = vpack.c.bf16 %v34, %v26
    %v67 = vunpack.c.l.bf16 %v51
    %v68 = vunpack.c.h.bf16 %v51
    %v69 = vunpack.c.l.bf16 %v52
    %v70 = vunpack.c.h.bf16 %v52
    %v71 = vunpack.c.l.bf16 %v53
    %v72 = vunpack.c.h.bf16 %v53
    %v73 = vunpack.c.l.bf16 %v54
    %v74 = vunpack.c.h.bf16 %v54
    %v75 = vunpack.c.l.bf16 %v55
    %v76 = vunpack.c.h.bf16 %v55
    %v77 = vunpack.c.l.bf16 %v56
    %v78 = vunpack.c.h.bf16 %v56
    %v79 = vunpack.c.l.bf16 %v57
    %v80 = vunpack.c.h.bf16 %v57
    %v81 = vunpack.c.l.bf16 %v58
    %v82 = vunpack.c.h.bf16 %v58
    %v83 = vsub.f32 %v35, %v67
    %v84 = vsub.f32 %v36, %v68
    %v85 = vsub.f32 %v37, %v69
    %v86 = vsub.f32 %v38, %v70
    %v87 = vsub.f32 %v39, %v71
    %v88 = vsub.f32 %v40, %v72
    %v89 = vsub.f32 %v41, %v73
    %v90 = vsub.f32 %v42, %v74
    %v91 = vsub.f32 %v43, %v75
    %v92 = vsub.f32 %v44, %v76
    %v93 = vsub.f32 %v45, %v77
    %v94 = vsub.f32 %v46, %v78
    %v95 = vsub.f32 %v47, %v79
    %v96 = vsub.f32 %v48, %v80
    %v97 = vsub.f32 %v49, %v81
    %v98 = vsub.f32 %v50, %v82
    %v99 = vpack.c.bf16 %v84, %v83
    %v100 = vpack.c.bf16 %v86, %v85
    %v101 = vpack.c.bf16 %v88, %v87
    %v102 = vpack.c.bf16 %v90, %v89
    %v103 = vpack.c.bf16 %v92, %v91
    %v104 = vpack.c.bf16 %v94, %v93
    %v105 = vpack.c.bf16 %v96, %v95
    %v106 = vpack.c.bf16 %v98, %v97
    %v107 = vunpack.c.l.bf16 %v59
    %v108 = vunpack.c.l.bf16 %v60
    %v109 = vunpack.c.l.bf16 %v61
    %v110 = vunpack.c.l.bf16 %v62
    %v111 = vunpack.c.l.bf16 %v63
    %v112 = vunpack.c.l.bf16 %v64
    %v113 = vunpack.c.l.bf16 %v65
    %v114 = vunpack.c.l.bf16 %v66
    %v115 = vunpack.c.h.bf16 %v59
    %v116 = vunpack.c.h.bf16 %v60
    %v117 = vunpack.c.h.bf16 %v61
    %v118 = vunpack.c.h.bf16 %v62
    %v119 = vunpack.c.h.bf16 %v63
    %v120 = vunpack.c.h.bf16 %v64
    %v121 = vunpack.c.h.bf16 %v65
    %v122 = vunpack.c.h.bf16 %v66
    %v123 = vsub.f32 %v19, %v107
    %v124 = vsub.f32 %v20, %v108
    %v125 = vsub.f32 %v21, %v109
    %v126 = vsub.f32 %v22, %v110
    %v127 = vsub.f32 %v23, %v111
    %v128 = vsub.f32 %v24, %v112
    %v129 = vsub.f32 %v25, %v113
    %v130 = vsub.f32 %v26, %v114
    %v131 = vsub.f32 %v27, %v115
    %v132 = vsub.f32 %v28, %v116
    %v133 = vsub.f32 %v29, %v117
    %v134 = vsub.f32 %v30, %v118
    %v135 = vsub.f32 %v31, %v119
    %v136 = vsub.f32 %v32, %v120
    %v137 = vsub.f32 %v33, %v121
    %v138 = vsub.f32 %v34, %v122
    %v139 = vpack.c.bf16 %v131, %v123
    %v140 = vpack.c.bf16 %v132, %v124
    %v141 = vpack.c.bf16 %v133, %v125
    %v142 = vpack.c.bf16 %v134, %v126
    %v143 = vpack.c.bf16 %v135, %v127
    %v144 = vpack.c.bf16 %v136, %v128
    %v145 = vpack.c.bf16 %v137, %v129
    %v146 = vpack.c.bf16 %v138, %v130
    %vm147 = vcmask 72704
    %v149 = vsel %vm147, %v51, 0
    %v152 = vsel %vm147, %v52, 0
    %v155 = vsel %vm147, %v53, 0
    %v158 = vsel %vm147, %v54, 0
    %v161 = vsel %vm147, %v55, 0
    %v164 = vsel %vm147, %v56, 0
    %v167 = vsel %vm147, %v57, 0
    %v170 = vsel %vm147, %v58, 0
    %vm172 = vcmask 1043456
    %vm173 = vcmask 1044480
    %v174 = vsel %vm172, 4294967295, 65535
    %v175 = vsel %vm173, %v174, 0
    %v177 = vand.u32 %v139, %v175
    %v180 = vand.u32 %v140, %v175
    %v183 = vand.u32 %v141, %v175
    %v186 = vand.u32 %v142, %v175
    %v189 = vand.u32 %v143, %v175
    %v192 = vand.u32 %v144, %v175
    %v195 = vand.u32 %v145, %v175
    %v198 = vand.u32 %v146, %v175
    %200 = vmatprep.subr.bf16.mxu0 %v180
    %201 = vmatpush1.bf16.msra.mxu0 %v177
    %202 = vmatprep.subr.bf16.mxu0 0
    %203 = vmatpush1.bf16.msra.mxu0 0
    %204 = vmatprep.subr.bf16.mxu0 0
    %205 = vmatpush1.bf16.msra.mxu0 0
    %206 = vmatprep.subr.bf16.mxu0 0
    %207 = vmatpush1.bf16.msra.mxu0 0
    %208 = vmatprep.subr.bf16.mxu0 0
    %209 = vmatpush1.bf16.msra.mxu0 0
    %210 = vmatprep.subr.bf16.mxu0 0
    %211 = vmatpush1.bf16.msra.mxu0 0
    %212 = vmatprep.subr.bf16.mxu0 0
    %213 = vmatpush1.bf16.msra.mxu0 0
    %214 = vmatprep.subr.bf16.mxu0 0
    %215 = vmatpush1.bf16.msra.mxu0 0
    %216 = vmatprep.subr.bf16.mxu0 0
    %217 = vmatpush1.bf16.msra.mxu0 0
    %218 = vmatprep.subr.bf16.mxu0 0
    %219 = vmatpush1.bf16.msra.mxu0 0
    %220 = vmatprep.subr.bf16.mxu0 0
    %221 = vmatpush1.bf16.msra.mxu0 0
    %222 = vmatprep.subr.bf16.mxu0 0
    %223 = vmatpush1.bf16.msra.mxu0 0
    %224 = vmatprep.subr.bf16.mxu0 0
    %225 = vmatpush1.bf16.msra.mxu0 0
    %226 = vmatprep.subr.bf16.mxu0 0
    %227 = vmatpush1.bf16.msra.mxu0 0
    %228 = vmatprep.subr.bf16.mxu0 0
    %229 = vmatpush1.bf16.msra.mxu0 0
    %230 = vmatprep.subr.bf16.mxu0 0
    %231 = vmatpush1.bf16.msra.mxu0 0
    %232 = vmatprep.mubr.bf16.mxu0 0
    %233 = vmatmul.mubr.bf16.gmra.mrb[0].mxu0 %v149
    %v234 = vpop.f32.mrb[0].mxu0
    %v235 = vadd.f32 0.0, %v234
    %v236 = vpop.f32.mrb[0].mxu0
    %v237 = vadd.f32 0.0, %v236
    %v238 = vpop.f32.mrb[0].mxu0
    %v239 = vadd.f32 0.0, %v238
    %v240 = vpop.f32.mrb[0].mxu0
    %v241 = vadd.f32 0.0, %v240
    %242 = vmatprep.mubr.bf16.mxu0 0
    %243 = vmatmul.mubr.bf16.gmra.mrb[0].mxu0 %v152
    %v244 = vpop.f32.mrb[0].mxu0
    %v245 = vadd.f32 0.0, %v244
    %v246 = vpop.f32.mrb[0].mxu0
    %v247 = vadd.f32 0.0, %v246
    %v248 = vpop.f32.mrb[0].mxu0
    %v249 = vadd.f32 0.0, %v248
    %v250 = vpop.f32.mrb[0].mxu0
    %v251 = vadd.f32 0.0, %v250
    %252 = vmatprep.mubr.bf16.mxu0 0
    %253 = vmatmul.mubr.bf16.gmra.mrb[0].mxu0 %v155
    %v254 = vpop.f32.mrb[0].mxu0
    %v255 = vadd.f32 0.0, %v254
    %v256 = vpop.f32.mrb[0].mxu0
    %v257 = vadd.f32 0.0, %v256
    %v258 = vpop.f32.mrb[0].mxu0
    %v259 = vadd.f32 0.0, %v258
    %v260 = vpop.f32.mrb[0].mxu0
    %v261 = vadd.f32 0.0, %v260
    %262 = vmatprep.mubr.bf16.mxu0 0
    %263 = vmatmul.mubr.bf16.gmra.mrb[0].mxu0 %v158
    %v264 = vpop.f32.mrb[0].mxu0
    %v265 = vadd.f32 0.0, %v264
    %v266 = vpop.f32.mrb[0].mxu0
    %v267 = vadd.f32 0.0, %v266
    %v268 = vpop.f32.mrb[0].mxu0
    %v269 = vadd.f32 0.0, %v268
    %v270 = vpop.f32.mrb[0].mxu0
    %v271 = vadd.f32 0.0, %v270
    %272 = vmatprep.mubr.bf16.mxu0 0
    %273 = vmatmul.mubr.bf16.gmra.mrb[0].mxu0 %v161
    %v274 = vpop.f32.mrb[0].mxu0
    %v275 = vadd.f32 0.0, %v274
    %v276 = vpop.f32.mrb[0].mxu0
    %v277 = vadd.f32 0.0, %v276
    %v278 = vpop.f32.mrb[0].mxu0
    %v279 = vadd.f32 0.0, %v278
    %v280 = vpop.f32.mrb[0].mxu0
    %v281 = vadd.f32 0.0, %v280
    %282 = vmatprep.mubr.bf16.mxu0 0
    %283 = vmatmul.mubr.bf16.gmra.mrb[0].mxu0 %v164
    %v284 = vpop.f32.mrb[0].mxu0
    %v285 = vadd.f32 0.0, %v284
    %v286 = vpop.f32.mrb[0].mxu0
    %v287 = vadd.f32 0.0, %v286
    %v288 = vpop.f32.mrb[0].mxu0
    %v289 = vadd.f32 0.0, %v288
    %v290 = vpop.f32.mrb[0].mxu0
    %v291 = vadd.f32 0.0, %v290
    %292 = vmatprep.mubr.bf16.mxu0 0
    %293 = vmatmul.mubr.bf16.gmra.mrb[0].mxu0 %v167
    %v294 = vpop.f32.mrb[0].mxu0
    %v295 = vadd.f32 0.0, %v294
    %v296 = vpop.f32.mrb[0].mxu0
    %v297 = vadd.f32 0.0, %v296
    %v298 = vpop.f32.mrb[0].mxu0
    %v299 = vadd.f32 0.0, %v298
    %v300 = vpop.f32.mrb[0].mxu0
    %v301 = vadd.f32 0.0, %v300
    %302 = vmatprep.mubr.bf16.mxu0 0
    %303 = vmatmul.mubr.bf16.gmra.mrb[0].mxu0 %v170
    %v304 = vpop.f32.mrb[0].mxu0
    %v305 = vadd.f32 0.0, %v304
    %v306 = vpop.f32.mrb[0].mxu0
    %v307 = vadd.f32 0.0, %v306
    %v308 = vpop.f32.mrb[0].mxu0
    %v309 = vadd.f32 0.0, %v308
    %v310 = vpop.f32.mrb[0].mxu0
    %v311 = vadd.f32 0.0, %v310
    %312 = vdwg.mxu0
    %313 = vmatprep.subr.bf16.mxu0 %v186
    %314 = vmatpush1.bf16.msra.mxu0 %v183
    %315 = vmatprep.subr.bf16.mxu0 0
    %316 = vmatpush1.bf16.msra.mxu0 0
    %317 = vmatprep.subr.bf16.mxu0 0
    %318 = vmatpush1.bf16.msra.mxu0 0
    %319 = vmatprep.subr.bf16.mxu0 0
    %320 = vmatpush1.bf16.msra.mxu0 0
    %321 = vmatprep.subr.bf16.mxu0 0
    %322 = vmatpush1.bf16.msra.mxu0 0
    %323 = vmatprep.subr.bf16.mxu0 0
    %324 = vmatpush1.bf16.msra.mxu0 0
    %325 = vmatprep.subr.bf16.mxu0 0
    %326 = vmatpush1.bf16.msra.mxu0 0
    %327 = vmatprep.subr.bf16.mxu0 0
    %328 = vmatpush1.bf16.msra.mxu0 0
    %329 = vmatprep.subr.bf16.mxu0 0
    %330 = vmatpush1.bf16.msra.mxu0 0
    %331 = vmatprep.subr.bf16.mxu0 0
    %332 = vmatpush1.bf16.msra.mxu0 0
    %333 = vmatprep.subr.bf16.mxu0 0
    %334 = vmatpush1.bf16.msra.mxu0 0
    %335 = vmatprep.subr.bf16.mxu0 0
    %336 = vmatpush1.bf16.msra.mxu0 0
    %337 = vmatprep.subr.bf16.mxu0 0
    %338 = vmatpush1.bf16.msra.mxu0 0
    %339 = vmatprep.subr.bf16.mxu0 0
    %340 = vmatpush1.bf16.msra.mxu0 0
    %341 = vmatprep.subr.bf16.mxu0 0
    %342 = vmatpush1.bf16.msra.mxu0 0
    %343 = vmatprep.subr.bf16.mxu0 0
    %344 = vmatpush1.bf16.msra.mxu0 0
    %345 = vmatprep.mubr.bf16.mxu0 0
    %346 = vmatmul.mubr.bf16.gmra.mrb[0].mxu0 %v149
    %v347 = vpop.f32.mrb[0].mxu0
    %v348 = vadd.f32 0.0, %v347
    %v349 = vpop.f32.mrb[0].mxu0
    %v350 = vadd.f32 0.0, %v349
    %v351 = vpop.f32.mrb[0].mxu0
    %v352 = vadd.f32 0.0, %v351
    %v353 = vpop.f32.mrb[0].mxu0
    %v354 = vadd.f32 0.0, %v353
    %355 = vmatprep.mubr.bf16.mxu0 0
    %356 = vmatmul.mubr.bf16.gmra.mrb[0].mxu0 %v152
    %v357 = vpop.f32.mrb[0].mxu0
    %v358 = vadd.f32 0.0, %v357
    %v359 = vpop.f32.mrb[0].mxu0
    %v360 = vadd.f32 0.0, %v359
    %v361 = vpop.f32.mrb[0].mxu0
    %v362 = vadd.f32 0.0, %v361
    %v363 = vpop.f32.mrb[0].mxu0
    %v364 = vadd.f32 0.0, %v363
    %365 = vmatprep.mubr.bf16.mxu0 0
    %366 = vmatmul.mubr.bf16.gmra.mrb[0].mxu0 %v155
    %v367 = vpop.f32.mrb[0].mxu0
    %v368 = vadd.f32 0.0, %v367
    %v369 = vpop.f32.mrb[0].mxu0
    %v370 = vadd.f32 0.0, %v369
    %v371 = vpop.f32.mrb[0].mxu0
    %v372 = vadd.f32 0.0, %v371
    %v373 = vpop.f32.mrb[0].mxu0
    %v374 = vadd.f32 0.0, %v373
    %375 = vmatprep.mubr.bf16.mxu0 0
    %376 = vmatmul.mubr.bf16.gmra.mrb[0].mxu0 %v158
    %v377 = vpop.f32.mrb[0].mxu0
    %v378 = vadd.f32 0.0, %v377
    %v379 = vpop.f32.mrb[0].mxu0
    %v380 = vadd.f32 0.0, %v379
    %v381 = vpop.f32.mrb[0].mxu0
    %v382 = vadd.f32 0.0, %v381
    %v383 = vpop.f32.mrb[0].mxu0
    %v384 = vadd.f32 0.0, %v383
    %385 = vmatprep.mubr.bf16.mxu0 0
    %386 = vmatmul.mubr.bf16.gmra.mrb[0].mxu0 %v161
    %v387 = vpop.f32.mrb[0].mxu0
    %v388 = vadd.f32 0.0, %v387
    %v389 = vpop.f32.mrb[0].mxu0
    %v390 = vadd.f32 0.0, %v389
    %v391 = vpop.f32.mrb[0].mxu0
    %v392 = vadd.f32 0.0, %v391
    %v393 = vpop.f32.mrb[0].mxu0
    %v394 = vadd.f32 0.0, %v393
    %395 = vmatprep.mubr.bf16.mxu0 0
    %396 = vmatmul.mubr.bf16.gmra.mrb[0].mxu0 %v164
    %v397 = vpop.f32.mrb[0].mxu0
    %v398 = vadd.f32 0.0, %v397
    %v399 = vpop.f32.mrb[0].mxu0
    %v400 = vadd.f32 0.0, %v399
    %v401 = vpop.f32.mrb[0].mxu0
    %v402 = vadd.f32 0.0, %v401
    %v403 = vpop.f32.mrb[0].mxu0
    %v404 = vadd.f32 0.0, %v403
    %405 = vmatprep.mubr.bf16.mxu0 0
    %406 = vmatmul.mubr.bf16.gmra.mrb[0].mxu0 %v167
    %v407 = vpop.f32.mrb[0].mxu0
    %v408 = vadd.f32 0.0, %v407
    %v409 = vpop.f32.mrb[0].mxu0
    %v410 = vadd.f32 0.0, %v409
    %v411 = vpop.f32.mrb[0].mxu0
    %v412 = vadd.f32 0.0, %v411
    %v413 = vpop.f32.mrb[0].mxu0
    %v414 = vadd.f32 0.0, %v413
    %415 = vmatprep.mubr.bf16.mxu0 0
    %416 = vmatmul.mubr.bf16.gmra.mrb[0].mxu0 %v170
    %v417 = vpop.f32.mrb[0].mxu0
    %v418 = vadd.f32 0.0, %v417
    %v419 = vpop.f32.mrb[0].mxu0
    %v420 = vadd.f32 0.0, %v419
    %v421 = vpop.f32.mrb[0].mxu0
    %v422 = vadd.f32 0.0, %v421
    %v423 = vpop.f32.mrb[0].mxu0
    %v424 = vadd.f32 0.0, %v423
    %425 = vdwg.mxu0
    %426 = vmatprep.subr.bf16.mxu0 %v192
    %427 = vmatpush1.bf16.msra.mxu0 %v189
    %428 = vmatprep.subr.bf16.mxu0 0
    %429 = vmatpush1.bf16.msra.mxu0 0
    %430 = vmatprep.subr.bf16.mxu0 0
    %431 = vmatpush1.bf16.msra.mxu0 0
    %432 = vmatprep.subr.bf16.mxu0 0
    %433 = vmatpush1.bf16.msra.mxu0 0
    %434 = vmatprep.subr.bf16.mxu0 0
    %435 = vmatpush1.bf16.msra.mxu0 0
    %436 = vmatprep.subr.bf16.mxu0 0
    %437 = vmatpush1.bf16.msra.mxu0 0
    %438 = vmatprep.subr.bf16.mxu0 0
    %439 = vmatpush1.bf16.msra.mxu0 0
    %440 = vmatprep.subr.bf16.mxu0 0
    %441 = vmatpush1.bf16.msra.mxu0 0
    %442 = vmatprep.subr.bf16.mxu0 0
    %443 = vmatpush1.bf16.msra.mxu0 0
    %444 = vmatprep.subr.bf16.mxu0 0
    %445 = vmatpush1.bf16.msra.mxu0 0
    %446 = vmatprep.subr.bf16.mxu0 0
    %447 = vmatpush1.bf16.msra.mxu0 0
    %448 = vmatprep.subr.bf16.mxu0 0
    %449 = vmatpush1.bf16.msra.mxu0 0
    %450 = vmatprep.subr.bf16.mxu0 0
    %451 = vmatpush1.bf16.msra.mxu0 0
    %452 = vmatprep.subr.bf16.mxu0 0
    %453 = vmatpush1.bf16.msra.mxu0 0
    %454 = vmatprep.subr.bf16.mxu0 0
    %455 = vmatpush1.bf16.msra.mxu0 0
    %456 = vmatprep.subr.bf16.mxu0 0
    %457 = vmatpush1.bf16.msra.mxu0 0
    %458 = vmatprep.mubr.bf16.mxu0 0
    %459 = vmatmul.mubr.bf16.gmra.mrb[0].mxu0 %v149
    %v460 = vpop.f32.mrb[0].mxu0
    %v461 = vadd.f32 0.0, %v460
    %v462 = vpop.f32.mrb[0].mxu0
    %v463 = vadd.f32 0.0, %v462
    %v464 = vpop.f32.mrb[0].mxu0
    %v465 = vadd.f32 0.0, %v464
    %v466 = vpop.f32.mrb[0].mxu0
    %v467 = vadd.f32 0.0, %v466
    %468 = vmatprep.mubr.bf16.mxu0 0
    %469 = vmatmul.mubr.bf16.gmra.mrb[0].mxu0 %v152
    %v470 = vpop.f32.mrb[0].mxu0
    %v471 = vadd.f32 0.0, %v470
    %v472 = vpop.f32.mrb[0].mxu0
    %v473 = vadd.f32 0.0, %v472
    %v474 = vpop.f32.mrb[0].mxu0
    %v475 = vadd.f32 0.0, %v474
    %v476 = vpop.f32.mrb[0].mxu0
    %v477 = vadd.f32 0.0, %v476
    %478 = vmatprep.mubr.bf16.mxu0 0
    %479 = vmatmul.mubr.bf16.gmra.mrb[0].mxu0 %v155
    %v480 = vpop.f32.mrb[0].mxu0
    %v481 = vadd.f32 0.0, %v480
    %v482 = vpop.f32.mrb[0].mxu0
    %v483 = vadd.f32 0.0, %v482
    %v484 = vpop.f32.mrb[0].mxu0
    %v485 = vadd.f32 0.0, %v484
    %v486 = vpop.f32.mrb[0].mxu0
    %v487 = vadd.f32 0.0, %v486
    %488 = vmatprep.mubr.bf16.mxu0 0
    %489 = vmatmul.mubr.bf16.gmra.mrb[0].mxu0 %v158
    %v490 = vpop.f32.mrb[0].mxu0
    %v491 = vadd.f32 0.0, %v490
    %v492 = vpop.f32.mrb[0].mxu0
    %v493 = vadd.f32 0.0, %v492
    %v494 = vpop.f32.mrb[0].mxu0
    %v495 = vadd.f32 0.0, %v494
    %v496 = vpop.f32.mrb[0].mxu0
    %v497 = vadd.f32 0.0, %v496
    %498 = vmatprep.mubr.bf16.mxu0 0
    %499 = vmatmul.mubr.bf16.gmra.mrb[0].mxu0 %v161
    %v500 = vpop.f32.mrb[0].mxu0
    %v501 = vadd.f32 0.0, %v500
    %v502 = vpop.f32.mrb[0].mxu0
    %v503 = vadd.f32 0.0, %v502
    %v504 = vpop.f32.mrb[0].mxu0
    %v505 = vadd.f32 0.0, %v504
    %v506 = vpop.f32.mrb[0].mxu0
    %v507 = vadd.f32 0.0, %v506
    %508 = vmatprep.mubr.bf16.mxu0 0
    %509 = vmatmul.mubr.bf16.gmra.mrb[0].mxu0 %v164
    %v510 = vpop.f32.mrb[0].mxu0
    %v511 = vadd.f32 0.0, %v510
    %v512 = vpop.f32.mrb[0].mxu0
    %v513 = vadd.f32 0.0, %v512
    %v514 = vpop.f32.mrb[0].mxu0
    %v515 = vadd.f32 0.0, %v514
    %v516 = vpop.f32.mrb[0].mxu0
    %v517 = vadd.f32 0.0, %v516
    %518 = vmatprep.mubr.bf16.mxu0 0
    %519 = vmatmul.mubr.bf16.gmra.mrb[0].mxu0 %v167
    %v520 = vpop.f32.mrb[0].mxu0
    %v521 = vadd.f32 0.0, %v520
    %v522 = vpop.f32.mrb[0].mxu0
    %v523 = vadd.f32 0.0, %v522
    %v524 = vpop.f32.mrb[0].mxu0
    %v525 = vadd.f32 0.0, %v524
    %v526 = vpop.f32.mrb[0].mxu0
    %v527 = vadd.f32 0.0, %v526
    %528 = vmatprep.mubr.bf16.mxu0 0
    %529 = vmatmul.mubr.bf16.gmra.mrb[0].mxu0 %v170
    %v530 = vpop.f32.mrb[0].mxu0
    %v531 = vadd.f32 0.0, %v530
    %v532 = vpop.f32.mrb[0].mxu0
    %v533 = vadd.f32 0.0, %v532
    %v534 = vpop.f32.mrb[0].mxu0
    %v535 = vadd.f32 0.0, %v534
    %v536 = vpop.f32.mrb[0].mxu0
    %v537 = vadd.f32 0.0, %v536
    %538 = vdwg.mxu0
    %539 = vmatprep.subr.bf16.mxu0 %v198
    %540 = vmatpush1.bf16.msra.mxu0 %v195
    %541 = vmatprep.subr.bf16.mxu0 0
    %542 = vmatpush1.bf16.msra.mxu0 0
    %543 = vmatprep.subr.bf16.mxu0 0
    %544 = vmatpush1.bf16.msra.mxu0 0
    %545 = vmatprep.subr.bf16.mxu0 0
    %546 = vmatpush1.bf16.msra.mxu0 0
    %547 = vmatprep.subr.bf16.mxu0 0
    %548 = vmatpush1.bf16.msra.mxu0 0
    %549 = vmatprep.subr.bf16.mxu0 0
    %550 = vmatpush1.bf16.msra.mxu0 0
    %551 = vmatprep.subr.bf16.mxu0 0
    %552 = vmatpush1.bf16.msra.mxu0 0
    %553 = vmatprep.subr.bf16.mxu0 0
    %554 = vmatpush1.bf16.msra.mxu0 0
    %555 = vmatprep.subr.bf16.mxu0 0
    %556 = vmatpush1.bf16.msra.mxu0 0
    %557 = vmatprep.subr.bf16.mxu0 0
    %558 = vmatpush1.bf16.msra.mxu0 0
    %559 = vmatprep.subr.bf16.mxu0 0
    %560 = vmatpush1.bf16.msra.mxu0 0
    %561 = vmatprep.subr.bf16.mxu0 0
    %562 = vmatpush1.bf16.msra.mxu0 0
    %563 = vmatprep.subr.bf16.mxu0 0
    %564 = vmatpush1.bf16.msra.mxu0 0
    %565 = vmatprep.subr.bf16.mxu0 0
    %566 = vmatpush1.bf16.msra.mxu0 0
    %567 = vmatprep.subr.bf16.mxu0 0
    %568 = vmatpush1.bf16.msra.mxu0 0
    %569 = vmatprep.subr.bf16.mxu0 0
    %570 = vmatpush1.bf16.msra.mxu0 0
    %571 = vmatprep.mubr.bf16.mxu0 0
    %572 = vmatmul.mubr.bf16.gmra.mrb[0].mxu0 %v149
    %v573 = vpop.f32.mrb[0].mxu0
    %v574 = vadd.f32 0.0, %v573
    %v575 = vpop.f32.mrb[0].mxu0
    %v576 = vadd.f32 0.0, %v575
    %v577 = vpop.f32.mrb[0].mxu0
    %v578 = vadd.f32 0.0, %v577
    %v579 = vpop.f32.mrb[0].mxu0
    %v580 = vadd.f32 0.0, %v579
    %581 = vmatprep.mubr.bf16.mxu0 0
    %582 = vmatmul.mubr.bf16.gmra.mrb[0].mxu0 %v152
    %v583 = vpop.f32.mrb[0].mxu0
    %v584 = vadd.f32 0.0, %v583
    %v585 = vpop.f32.mrb[0].mxu0
    %v586 = vadd.f32 0.0, %v585
    %v587 = vpop.f32.mrb[0].mxu0
    %v588 = vadd.f32 0.0, %v587
    %v589 = vpop.f32.mrb[0].mxu0
    %v590 = vadd.f32 0.0, %v589
    %591 = vmatprep.mubr.bf16.mxu0 0
    %592 = vmatmul.mubr.bf16.gmra.mrb[0].mxu0 %v155
    %v593 = vpop.f32.mrb[0].mxu0
    %v594 = vadd.f32 0.0, %v593
    %v595 = vpop.f32.mrb[0].mxu0
    %v596 = vadd.f32 0.0, %v595
    %v597 = vpop.f32.mrb[0].mxu0
    %v598 = vadd.f32 0.0, %v597
    %v599 = vpop.f32.mrb[0].mxu0
    %v600 = vadd.f32 0.0, %v599
    %601 = vmatprep.mubr.bf16.mxu0 0
    %602 = vmatmul.mubr.bf16.gmra.mrb[0].mxu0 %v158
    %v603 = vpop.f32.mrb[0].mxu0
    %v604 = vadd.f32 0.0, %v603
    %v605 = vpop.f32.mrb[0].mxu0
    %v606 = vadd.f32 0.0, %v605
    %v607 = vpop.f32.mrb[0].mxu0
    %v608 = vadd.f32 0.0, %v607
    %v609 = vpop.f32.mrb[0].mxu0
    %v610 = vadd.f32 0.0, %v609
    %611 = vmatprep.mubr.bf16.mxu0 0
    %612 = vmatmul.mubr.bf16.gmra.mrb[0].mxu0 %v161
    %v613 = vpop.f32.mrb[0].mxu0
    %v614 = vadd.f32 0.0, %v613
    %v615 = vpop.f32.mrb[0].mxu0
    %v616 = vadd.f32 0.0, %v615
    %v617 = vpop.f32.mrb[0].mxu0
    %v618 = vadd.f32 0.0, %v617
    %v619 = vpop.f32.mrb[0].mxu0
    %v620 = vadd.f32 0.0, %v619
    %621 = vmatprep.mubr.bf16.mxu0 0
    %622 = vmatmul.mubr.bf16.gmra.mrb[0].mxu0 %v164
    %v623 = vpop.f32.mrb[0].mxu0
    %v624 = vadd.f32 0.0, %v623
    %v625 = vpop.f32.mrb[0].mxu0
    %v626 = vadd.f32 0.0, %v625
    %v627 = vpop.f32.mrb[0].mxu0
    %v628 = vadd.f32 0.0, %v627
    %v629 = vpop.f32.mrb[0].mxu0
    %v630 = vadd.f32 0.0, %v629
    %631 = vmatprep.mubr.bf16.mxu0 0
    %632 = vmatmul.mubr.bf16.gmra.mrb[0].mxu0 %v167
    %v633 = vpop.f32.mrb[0].mxu0
    %v634 = vadd.f32 0.0, %v633
    %v635 = vpop.f32.mrb[0].mxu0
    %v636 = vadd.f32 0.0, %v635
    %v637 = vpop.f32.mrb[0].mxu0
    %v638 = vadd.f32 0.0, %v637
    %v639 = vpop.f32.mrb[0].mxu0
    %v640 = vadd.f32 0.0, %v639
    %641 = vmatprep.mubr.bf16.mxu0 0
    %642 = vmatmul.mubr.bf16.gmra.mrb[0].mxu0 %v170
    %v643 = vpop.f32.mrb[0].mxu0
    %v644 = vadd.f32 0.0, %v643
    %v645 = vpop.f32.mrb[0].mxu0
    %v646 = vadd.f32 0.0, %v645
    %v647 = vpop.f32.mrb[0].mxu0
    %v648 = vadd.f32 0.0, %v647
    %v649 = vpop.f32.mrb[0].mxu0
    %v650 = vadd.f32 0.0, %v649
    %651 = vdwg.mxu0
    %v653 = vand.u32 %v59, %v175
    %v656 = vand.u32 %v60, %v175
    %v659 = vand.u32 %v61, %v175
    %v662 = vand.u32 %v62, %v175
    %v665 = vand.u32 %v63, %v175
    %v668 = vand.u32 %v64, %v175
    %v671 = vand.u32 %v65, %v175
    %v674 = vand.u32 %v66, %v175
    %676 = vmatprep.subr.bf16.mxu0 %v656
    %677 = vmatpush1.bf16.msra.mxu0 %v653
    %678 = vmatprep.subr.bf16.mxu0 0
    %679 = vmatpush1.bf16.msra.mxu0 0
    %680 = vmatprep.subr.bf16.mxu0 0
    %681 = vmatpush1.bf16.msra.mxu0 0
    %682 = vmatprep.subr.bf16.mxu0 0
    %683 = vmatpush1.bf16.msra.mxu0 0
    %684 = vmatprep.subr.bf16.mxu0 0
    %685 = vmatpush1.bf16.msra.mxu0 0
    %686 = vmatprep.subr.bf16.mxu0 0
    %687 = vmatpush1.bf16.msra.mxu0 0
    %688 = vmatprep.subr.bf16.mxu0 0
    %689 = vmatpush1.bf16.msra.mxu0 0
    %690 = vmatprep.subr.bf16.mxu0 0
    %691 = vmatpush1.bf16.msra.mxu0 0
    %692 = vmatprep.subr.bf16.mxu0 0
    %693 = vmatpush1.bf16.msra.mxu0 0
    %694 = vmatprep.subr.bf16.mxu0 0
    %695 = vmatpush1.bf16.msra.mxu0 0
    %696 = vmatprep.subr.bf16.mxu0 0
    %697 = vmatpush1.bf16.msra.mxu0 0
    %698 = vmatprep.subr.bf16.mxu0 0
    %699 = vmatpush1.bf16.msra.mxu0 0
    %700 = vmatprep.subr.bf16.mxu0 0
    %701 = vmatpush1.bf16.msra.mxu0 0
    %702 = vmatprep.subr.bf16.mxu0 0
    %703 = vmatpush1.bf16.msra.mxu0 0
    %704 = vmatprep.subr.bf16.mxu0 0
    %705 = vmatpush1.bf16.msra.mxu0 0
    %706 = vmatprep.subr.bf16.mxu0 0
    %707 = vmatpush1.bf16.msra.mxu0 0
    %708 = vmatprep.mubr.bf16.mxu0 0
    %709 = vmatmul.mubr.bf16.gmra.mrb[0].mxu0 %v149
    %v710 = vpop.f32.mrb[0].mxu0
    %v711 = vadd.f32 %v235, %v710
    %v712 = vpop.f32.mrb[0].mxu0
    %v713 = vadd.f32 %v237, %v712
    %v714 = vpop.f32.mrb[0].mxu0
    %v715 = vadd.f32 %v239, %v714
    %v716 = vpop.f32.mrb[0].mxu0
    %v717 = vadd.f32 %v241, %v716
    %718 = vmatprep.mubr.bf16.mxu0 0
    %719 = vmatmul.mubr.bf16.gmra.mrb[0].mxu0 %v152
    %v720 = vpop.f32.mrb[0].mxu0
    %v721 = vadd.f32 %v245, %v720
    %v722 = vpop.f32.mrb[0].mxu0
    %v723 = vadd.f32 %v247, %v722
    %v724 = vpop.f32.mrb[0].mxu0
    %v725 = vadd.f32 %v249, %v724
    %v726 = vpop.f32.mrb[0].mxu0
    %v727 = vadd.f32 %v251, %v726
    %728 = vmatprep.mubr.bf16.mxu0 0
    %729 = vmatmul.mubr.bf16.gmra.mrb[0].mxu0 %v155
    %v730 = vpop.f32.mrb[0].mxu0
    %v731 = vadd.f32 %v255, %v730
    %v732 = vpop.f32.mrb[0].mxu0
    %v733 = vadd.f32 %v257, %v732
    %v734 = vpop.f32.mrb[0].mxu0
    %v735 = vadd.f32 %v259, %v734
    %v736 = vpop.f32.mrb[0].mxu0
    %v737 = vadd.f32 %v261, %v736
    %738 = vmatprep.mubr.bf16.mxu0 0
    %739 = vmatmul.mubr.bf16.gmra.mrb[0].mxu0 %v158
    %v740 = vpop.f32.mrb[0].mxu0
    %v741 = vadd.f32 %v265, %v740
    %v742 = vpop.f32.mrb[0].mxu0
    %v743 = vadd.f32 %v267, %v742
    %v744 = vpop.f32.mrb[0].mxu0
    %v745 = vadd.f32 %v269, %v744
    %v746 = vpop.f32.mrb[0].mxu0
    %v747 = vadd.f32 %v271, %v746
    %748 = vmatprep.mubr.bf16.mxu0 0
    %749 = vmatmul.mubr.bf16.gmra.mrb[0].mxu0 %v161
    %v750 = vpop.f32.mrb[0].mxu0
    %v751 = vadd.f32 %v275, %v750
    %v752 = vpop.f32.mrb[0].mxu0
    %v753 = vadd.f32 %v277, %v752
    %v754 = vpop.f32.mrb[0].mxu0
    %v755 = vadd.f32 %v279, %v754
    %v756 = vpop.f32.mrb[0].mxu0
    %v757 = vadd.f32 %v281, %v756
    %758 = vmatprep.mubr.bf16.mxu0 0
    %759 = vmatmul.mubr.bf16.gmra.mrb[0].mxu0 %v164
    %v760 = vpop.f32.mrb[0].mxu0
    %v761 = vadd.f32 %v285, %v760
    %v762 = vpop.f32.mrb[0].mxu0
    %v763 = vadd.f32 %v287, %v762
    %v764 = vpop.f32.mrb[0].mxu0
    %v765 = vadd.f32 %v289, %v764
    %v766 = vpop.f32.mrb[0].mxu0
    %v767 = vadd.f32 %v291, %v766
    %768 = vmatprep.mubr.bf16.mxu0 0
    %769 = vmatmul.mubr.bf16.gmra.mrb[0].mxu0 %v167
    %v770 = vpop.f32.mrb[0].mxu0
    %v771 = vadd.f32 %v295, %v770
    %v772 = vpop.f32.mrb[0].mxu0
    %v773 = vadd.f32 %v297, %v772
    %v774 = vpop.f32.mrb[0].mxu0
    %v775 = vadd.f32 %v299, %v774
    %v776 = vpop.f32.mrb[0].mxu0
    %v777 = vadd.f32 %v301, %v776
    %778 = vmatprep.mubr.bf16.mxu0 0
    %779 = vmatmul.mubr.bf16.gmra.mrb[0].mxu0 %v170
    %v780 = vpop.f32.mrb[0].mxu0
    %v781 = vadd.f32 %v305, %v780
    %v782 = vpop.f32.mrb[0].mxu0
    %v783 = vadd.f32 %v307, %v782
    %v784 = vpop.f32.mrb[0].mxu0
    %v785 = vadd.f32 %v309, %v784
    %v786 = vpop.f32.mrb[0].mxu0
    %v787 = vadd.f32 %v311, %v786
    %788 = vdwg.mxu0
    %789 = vmatprep.subr.bf16.mxu0 %v662
    %790 = vmatpush1.bf16.msra.mxu0 %v659
    %791 = vmatprep.subr.bf16.mxu0 0
    %792 = vmatpush1.bf16.msra.mxu0 0
    %793 = vmatprep.subr.bf16.mxu0 0
    %794 = vmatpush1.bf16.msra.mxu0 0
    %795 = vmatprep.subr.bf16.mxu0 0
    %796 = vmatpush1.bf16.msra.mxu0 0
    %797 = vmatprep.subr.bf16.mxu0 0
    %798 = vmatpush1.bf16.msra.mxu0 0
    %799 = vmatprep.subr.bf16.mxu0 0
    %800 = vmatpush1.bf16.msra.mxu0 0
    %801 = vmatprep.subr.bf16.mxu0 0
    %802 = vmatpush1.bf16.msra.mxu0 0
    %803 = vmatprep.subr.bf16.mxu0 0
    %804 = vmatpush1.bf16.msra.mxu0 0
    %805 = vmatprep.subr.bf16.mxu0 0
    %806 = vmatpush1.bf16.msra.mxu0 0
    %807 = vmatprep.subr.bf16.mxu0 0
    %808 = vmatpush1.bf16.msra.mxu0 0
    %809 = vmatprep.subr.bf16.mxu0 0
    %810 = vmatpush1.bf16.msra.mxu0 0
    %811 = vmatprep.subr.bf16.mxu0 0
    %812 = vmatpush1.bf16.msra.mxu0 0
    %813 = vmatprep.subr.bf16.mxu0 0
    %814 = vmatpush1.bf16.msra.mxu0 0
    %815 = vmatprep.subr.bf16.mxu0 0
    %816 = vmatpush1.bf16.msra.mxu0 0
    %817 = vmatprep.subr.bf16.mxu0 0
    %818 = vmatpush1.bf16.msra.mxu0 0
    %819 = vmatprep.subr.bf16.mxu0 0
    %820 = vmatpush1.bf16.msra.mxu0 0
    %821 = vmatprep.mubr.bf16.mxu0 0
    %822 = vmatmul.mubr.bf16.gmra.mrb[0].mxu0 %v149
    %v823 = vpop.f32.mrb[0].mxu0
    %v824 = vadd.f32 %v348, %v823
    %v825 = vpop.f32.mrb[0].mxu0
    %v826 = vadd.f32 %v350, %v825
    %v827 = vpop.f32.mrb[0].mxu0
    %v828 = vadd.f32 %v352, %v827
    %v829 = vpop.f32.mrb[0].mxu0
    %v830 = vadd.f32 %v354, %v829
    %831 = vmatprep.mubr.bf16.mxu0 0
    %832 = vmatmul.mubr.bf16.gmra.mrb[0].mxu0 %v152
    %v833 = vpop.f32.mrb[0].mxu0
    %v834 = vadd.f32 %v358, %v833
    %v835 = vpop.f32.mrb[0].mxu0
    %v836 = vadd.f32 %v360, %v835
    %v837 = vpop.f32.mrb[0].mxu0
    %v838 = vadd.f32 %v362, %v837
    %v839 = vpop.f32.mrb[0].mxu0
    %v840 = vadd.f32 %v364, %v839
    %841 = vmatprep.mubr.bf16.mxu0 0
    %842 = vmatmul.mubr.bf16.gmra.mrb[0].mxu0 %v155
    %v843 = vpop.f32.mrb[0].mxu0
    %v844 = vadd.f32 %v368, %v843
    %v845 = vpop.f32.mrb[0].mxu0
    %v846 = vadd.f32 %v370, %v845
    %v847 = vpop.f32.mrb[0].mxu0
    %v848 = vadd.f32 %v372, %v847
    %v849 = vpop.f32.mrb[0].mxu0
    %v850 = vadd.f32 %v374, %v849
    %851 = vmatprep.mubr.bf16.mxu0 0
    %852 = vmatmul.mubr.bf16.gmra.mrb[0].mxu0 %v158
    %v853 = vpop.f32.mrb[0].mxu0
    %v854 = vadd.f32 %v378, %v853
    %v855 = vpop.f32.mrb[0].mxu0
    %v856 = vadd.f32 %v380, %v855
    %v857 = vpop.f32.mrb[0].mxu0
    %v858 = vadd.f32 %v382, %v857
    %v859 = vpop.f32.mrb[0].mxu0
    %v860 = vadd.f32 %v384, %v859
    %861 = vmatprep.mubr.bf16.mxu0 0
    %862 = vmatmul.mubr.bf16.gmra.mrb[0].mxu0 %v161
    %v863 = vpop.f32.mrb[0].mxu0
    %v864 = vadd.f32 %v388, %v863
    %v865 = vpop.f32.mrb[0].mxu0
    %v866 = vadd.f32 %v390, %v865
    %v867 = vpop.f32.mrb[0].mxu0
    %v868 = vadd.f32 %v392, %v867
    %v869 = vpop.f32.mrb[0].mxu0
    %v870 = vadd.f32 %v394, %v869
    %871 = vmatprep.mubr.bf16.mxu0 0
    %872 = vmatmul.mubr.bf16.gmra.mrb[0].mxu0 %v164
    %v873 = vpop.f32.mrb[0].mxu0
    %v874 = vadd.f32 %v398, %v873
    %v875 = vpop.f32.mrb[0].mxu0
    %v876 = vadd.f32 %v400, %v875
    %v877 = vpop.f32.mrb[0].mxu0
    %v878 = vadd.f32 %v402, %v877
    %v879 = vpop.f32.mrb[0].mxu0
    %v880 = vadd.f32 %v404, %v879
    %881 = vmatprep.mubr.bf16.mxu0 0
    %882 = vmatmul.mubr.bf16.gmra.mrb[0].mxu0 %v167
    %v883 = vpop.f32.mrb[0].mxu0
    %v884 = vadd.f32 %v408, %v883
    %v885 = vpop.f32.mrb[0].mxu0
    %v886 = vadd.f32 %v410, %v885
    %v887 = vpop.f32.mrb[0].mxu0
    %v888 = vadd.f32 %v412, %v887
    %v889 = vpop.f32.mrb[0].mxu0
    %v890 = vadd.f32 %v414, %v889
    %891 = vmatprep.mubr.bf16.mxu0 0
    %892 = vmatmul.mubr.bf16.gmra.mrb[0].mxu0 %v170
    %v893 = vpop.f32.mrb[0].mxu0
    %v894 = vadd.f32 %v418, %v893
    %v895 = vpop.f32.mrb[0].mxu0
    %v896 = vadd.f32 %v420, %v895
    %v897 = vpop.f32.mrb[0].mxu0
    %v898 = vadd.f32 %v422, %v897
    %v899 = vpop.f32.mrb[0].mxu0
    %v900 = vadd.f32 %v424, %v899
    %901 = vdwg.mxu0
    %902 = vmatprep.subr.bf16.mxu0 %v668
    %903 = vmatpush1.bf16.msra.mxu0 %v665
    %904 = vmatprep.subr.bf16.mxu0 0
    %905 = vmatpush1.bf16.msra.mxu0 0
    %906 = vmatprep.subr.bf16.mxu0 0
    %907 = vmatpush1.bf16.msra.mxu0 0
    %908 = vmatprep.subr.bf16.mxu0 0
    %909 = vmatpush1.bf16.msra.mxu0 0
    %910 = vmatprep.subr.bf16.mxu0 0
    %911 = vmatpush1.bf16.msra.mxu0 0
    %912 = vmatprep.subr.bf16.mxu0 0
    %913 = vmatpush1.bf16.msra.mxu0 0
    %914 = vmatprep.subr.bf16.mxu0 0
    %915 = vmatpush1.bf16.msra.mxu0 0
    %916 = vmatprep.subr.bf16.mxu0 0
    %917 = vmatpush1.bf16.msra.mxu0 0
    %918 = vmatprep.subr.bf16.mxu0 0
    %919 = vmatpush1.bf16.msra.mxu0 0
    %920 = vmatprep.subr.bf16.mxu0 0
    %921 = vmatpush1.bf16.msra.mxu0 0
    %922 = vmatprep.subr.bf16.mxu0 0
    %923 = vmatpush1.bf16.msra.mxu0 0
    %924 = vmatprep.subr.bf16.mxu0 0
    %925 = vmatpush1.bf16.msra.mxu0 0
    %926 = vmatprep.subr.bf16.mxu0 0
    %927 = vmatpush1.bf16.msra.mxu0 0
    %928 = vmatprep.subr.bf16.mxu0 0
    %929 = vmatpush1.bf16.msra.mxu0 0
    %930 = vmatprep.subr.bf16.mxu0 0
    %931 = vmatpush1.bf16.msra.mxu0 0
    %932 = vmatprep.subr.bf16.mxu0 0
    %933 = vmatpush1.bf16.msra.mxu0 0
    %934 = vmatprep.mubr.bf16.mxu0 0
    %935 = vmatmul.mubr.bf16.gmra.mrb[0].mxu0 %v149
    %v936 = vpop.f32.mrb[0].mxu0
    %v937 = vadd.f32 %v461, %v936
    %v938 = vpop.f32.mrb[0].mxu0
    %v939 = vadd.f32 %v463, %v938
    %v940 = vpop.f32.mrb[0].mxu0
    %v941 = vadd.f32 %v465, %v940
    %v942 = vpop.f32.mrb[0].mxu0
    %v943 = vadd.f32 %v467, %v942
    %944 = vmatprep.mubr.bf16.mxu0 0
    %945 = vmatmul.mubr.bf16.gmra.mrb[0].mxu0 %v152
    %v946 = vpop.f32.mrb[0].mxu0
    %v947 = vadd.f32 %v471, %v946
    %v948 = vpop.f32.mrb[0].mxu0
    %v949 = vadd.f32 %v473, %v948
    %v950 = vpop.f32.mrb[0].mxu0
    %v951 = vadd.f32 %v475, %v950
    %v952 = vpop.f32.mrb[0].mxu0
    %v953 = vadd.f32 %v477, %v952
    %954 = vmatprep.mubr.bf16.mxu0 0
    %955 = vmatmul.mubr.bf16.gmra.mrb[0].mxu0 %v155
    %v956 = vpop.f32.mrb[0].mxu0
    %v957 = vadd.f32 %v481, %v956
    %v958 = vpop.f32.mrb[0].mxu0
    %v959 = vadd.f32 %v483, %v958
    %v960 = vpop.f32.mrb[0].mxu0
    %v961 = vadd.f32 %v485, %v960
    %v962 = vpop.f32.mrb[0].mxu0
    %v963 = vadd.f32 %v487, %v962
    %964 = vmatprep.mubr.bf16.mxu0 0
    %965 = vmatmul.mubr.bf16.gmra.mrb[0].mxu0 %v158
    %v966 = vpop.f32.mrb[0].mxu0
    %v967 = vadd.f32 %v491, %v966
    %v968 = vpop.f32.mrb[0].mxu0
    %v969 = vadd.f32 %v493, %v968
    %v970 = vpop.f32.mrb[0].mxu0
    %v971 = vadd.f32 %v495, %v970
    %v972 = vpop.f32.mrb[0].mxu0
    %v973 = vadd.f32 %v497, %v972
    %974 = vmatprep.mubr.bf16.mxu0 0
    %975 = vmatmul.mubr.bf16.gmra.mrb[0].mxu0 %v161
    %v976 = vpop.f32.mrb[0].mxu0
    %v977 = vadd.f32 %v501, %v976
    %v978 = vpop.f32.mrb[0].mxu0
    %v979 = vadd.f32 %v503, %v978
    %v980 = vpop.f32.mrb[0].mxu0
    %v981 = vadd.f32 %v505, %v980
    %v982 = vpop.f32.mrb[0].mxu0
    %v983 = vadd.f32 %v507, %v982
    %984 = vmatprep.mubr.bf16.mxu0 0
    %985 = vmatmul.mubr.bf16.gmra.mrb[0].mxu0 %v164
    %v986 = vpop.f32.mrb[0].mxu0
    %v987 = vadd.f32 %v511, %v986
    %v988 = vpop.f32.mrb[0].mxu0
    %v989 = vadd.f32 %v513, %v988
    %v990 = vpop.f32.mrb[0].mxu0
    %v991 = vadd.f32 %v515, %v990
    %v992 = vpop.f32.mrb[0].mxu0
    %v993 = vadd.f32 %v517, %v992
    %994 = vmatprep.mubr.bf16.mxu0 0
    %995 = vmatmul.mubr.bf16.gmra.mrb[0].mxu0 %v167
    %v996 = vpop.f32.mrb[0].mxu0
    %v997 = vadd.f32 %v521, %v996
    %v998 = vpop.f32.mrb[0].mxu0
    %v999 = vadd.f32 %v523, %v998
    %v1000 = vpop.f32.mrb[0].mxu0
    %v1001 = vadd.f32 %v525, %v1000
    %v1002 = vpop.f32.mrb[0].mxu0
    %v1003 = vadd.f32 %v527, %v1002
    %1004 = vmatprep.mubr.bf16.mxu0 0
    %1005 = vmatmul.mubr.bf16.gmra.mrb[0].mxu0 %v170
    %v1006 = vpop.f32.mrb[0].mxu0
    %v1007 = vadd.f32 %v531, %v1006
    %v1008 = vpop.f32.mrb[0].mxu0
    %v1009 = vadd.f32 %v533, %v1008
    %v1010 = vpop.f32.mrb[0].mxu0
    %v1011 = vadd.f32 %v535, %v1010
    %v1012 = vpop.f32.mrb[0].mxu0
    %v1013 = vadd.f32 %v537, %v1012
    %1014 = vdwg.mxu0
    %1015 = vmatprep.subr.bf16.mxu0 %v674
    %1016 = vmatpush1.bf16.msra.mxu0 %v671
    %1017 = vmatprep.subr.bf16.mxu0 0
    %1018 = vmatpush1.bf16.msra.mxu0 0
    %1019 = vmatprep.subr.bf16.mxu0 0
    %1020 = vmatpush1.bf16.msra.mxu0 0
    %1021 = vmatprep.subr.bf16.mxu0 0
    %1022 = vmatpush1.bf16.msra.mxu0 0
    %1023 = vmatprep.subr.bf16.mxu0 0
    %1024 = vmatpush1.bf16.msra.mxu0 0
    %1025 = vmatprep.subr.bf16.mxu0 0
    %1026 = vmatpush1.bf16.msra.mxu0 0
    %1027 = vmatprep.subr.bf16.mxu0 0
    %1028 = vmatpush1.bf16.msra.mxu0 0
    %1029 = vmatprep.subr.bf16.mxu0 0
    %1030 = vmatpush1.bf16.msra.mxu0 0
    %1031 = vmatprep.subr.bf16.mxu0 0
    %1032 = vmatpush1.bf16.msra.mxu0 0
    %1033 = vmatprep.subr.bf16.mxu0 0
    %1034 = vmatpush1.bf16.msra.mxu0 0
    %1035 = vmatprep.subr.bf16.mxu0 0
    %1036 = vmatpush1.bf16.msra.mxu0 0
    %1037 = vmatprep.subr.bf16.mxu0 0
    %1038 = vmatpush1.bf16.msra.mxu0 0
    %1039 = vmatprep.subr.bf16.mxu0 0
    %1040 = vmatpush1.bf16.msra.mxu0 0
    %1041 = vmatprep.subr.bf16.mxu0 0
    %1042 = vmatpush1.bf16.msra.mxu0 0
    %1043 = vmatprep.subr.bf16.mxu0 0
    %1044 = vmatpush1.bf16.msra.mxu0 0
    %1045 = vmatprep.subr.bf16.mxu0 0
    %1046 = vmatpush1.bf16.msra.mxu0 0
    %1047 = vmatprep.mubr.bf16.mxu0 0
    %1048 = vmatmul.mubr.bf16.gmra.mrb[0].mxu0 %v149
    %v1049 = vpop.f32.mrb[0].mxu0
    %v1050 = vadd.f32 %v574, %v1049
    %v1051 = vpop.f32.mrb[0].mxu0
    %v1052 = vadd.f32 %v576, %v1051
    %v1053 = vpop.f32.mrb[0].mxu0
    %v1054 = vadd.f32 %v578, %v1053
    %v1055 = vpop.f32.mrb[0].mxu0
    %v1056 = vadd.f32 %v580, %v1055
    %1057 = vmatprep.mubr.bf16.mxu0 0
    %1058 = vmatmul.mubr.bf16.gmra.mrb[0].mxu0 %v152
    %v1059 = vpop.f32.mrb[0].mxu0
    %v1060 = vadd.f32 %v584, %v1059
    %v1061 = vpop.f32.mrb[0].mxu0
    %v1062 = vadd.f32 %v586, %v1061
    %v1063 = vpop.f32.mrb[0].mxu0
    %v1064 = vadd.f32 %v588, %v1063
    %v1065 = vpop.f32.mrb[0].mxu0
    %v1066 = vadd.f32 %v590, %v1065
    %1067 = vmatprep.mubr.bf16.mxu0 0
    %1068 = vmatmul.mubr.bf16.gmra.mrb[0].mxu0 %v155
    %v1069 = vpop.f32.mrb[0].mxu0
    %v1070 = vadd.f32 %v594, %v1069
    %v1071 = vpop.f32.mrb[0].mxu0
    %v1072 = vadd.f32 %v596, %v1071
    %v1073 = vpop.f32.mrb[0].mxu0
    %v1074 = vadd.f32 %v598, %v1073
    %v1075 = vpop.f32.mrb[0].mxu0
    %v1076 = vadd.f32 %v600, %v1075
    %1077 = vmatprep.mubr.bf16.mxu0 0
    %1078 = vmatmul.mubr.bf16.gmra.mrb[0].mxu0 %v158
    %v1079 = vpop.f32.mrb[0].mxu0
    %v1080 = vadd.f32 %v604, %v1079
    %v1081 = vpop.f32.mrb[0].mxu0
    %v1082 = vadd.f32 %v606, %v1081
    %v1083 = vpop.f32.mrb[0].mxu0
    %v1084 = vadd.f32 %v608, %v1083
    %v1085 = vpop.f32.mrb[0].mxu0
    %v1086 = vadd.f32 %v610, %v1085
    %1087 = vmatprep.mubr.bf16.mxu0 0
    %1088 = vmatmul.mubr.bf16.gmra.mrb[0].mxu0 %v161
    %v1089 = vpop.f32.mrb[0].mxu0
    %v1090 = vadd.f32 %v614, %v1089
    %v1091 = vpop.f32.mrb[0].mxu0
    %v1092 = vadd.f32 %v616, %v1091
    %v1093 = vpop.f32.mrb[0].mxu0
    %v1094 = vadd.f32 %v618, %v1093
    %v1095 = vpop.f32.mrb[0].mxu0
    %v1096 = vadd.f32 %v620, %v1095
    %1097 = vmatprep.mubr.bf16.mxu0 0
    %1098 = vmatmul.mubr.bf16.gmra.mrb[0].mxu0 %v164
    %v1099 = vpop.f32.mrb[0].mxu0
    %v1100 = vadd.f32 %v624, %v1099
    %v1101 = vpop.f32.mrb[0].mxu0
    %v1102 = vadd.f32 %v626, %v1101
    %v1103 = vpop.f32.mrb[0].mxu0
    %v1104 = vadd.f32 %v628, %v1103
    %v1105 = vpop.f32.mrb[0].mxu0
    %v1106 = vadd.f32 %v630, %v1105
    %1107 = vmatprep.mubr.bf16.mxu0 0
    %1108 = vmatmul.mubr.bf16.gmra.mrb[0].mxu0 %v167
    %v1109 = vpop.f32.mrb[0].mxu0
    %v1110 = vadd.f32 %v634, %v1109
    %v1111 = vpop.f32.mrb[0].mxu0
    %v1112 = vadd.f32 %v636, %v1111
    %v1113 = vpop.f32.mrb[0].mxu0
    %v1114 = vadd.f32 %v638, %v1113
    %v1115 = vpop.f32.mrb[0].mxu0
    %v1116 = vadd.f32 %v640, %v1115
    %1117 = vmatprep.mubr.bf16.mxu0 0
    %1118 = vmatmul.mubr.bf16.gmra.mrb[0].mxu0 %v170
    %v1119 = vpop.f32.mrb[0].mxu0
    %v1120 = vadd.f32 %v644, %v1119
    %v1121 = vpop.f32.mrb[0].mxu0
    %v1122 = vadd.f32 %v646, %v1121
    %v1123 = vpop.f32.mrb[0].mxu0
    %v1124 = vadd.f32 %v648, %v1123
    %v1125 = vpop.f32.mrb[0].mxu0
    %v1126 = vadd.f32 %v650, %v1125
    %1127 = vdwg.mxu0
    %v1129 = vsel %vm147, %v99, 0
    %v1132 = vsel %vm147, %v100, 0
    %v1135 = vsel %vm147, %v101, 0
    %v1138 = vsel %vm147, %v102, 0
    %v1141 = vsel %vm147, %v103, 0
    %v1144 = vsel %vm147, %v104, 0
    %v1147 = vsel %vm147, %v105, 0
    %v1150 = vsel %vm147, %v106, 0
    %1152 = vmatprep.subr.bf16.mxu0 %v656
    %1153 = vmatpush1.bf16.msra.mxu0 %v653
    %1154 = vmatprep.subr.bf16.mxu0 0
    %1155 = vmatpush1.bf16.msra.mxu0 0
    %1156 = vmatprep.subr.bf16.mxu0 0
    %1157 = vmatpush1.bf16.msra.mxu0 0
    %1158 = vmatprep.subr.bf16.mxu0 0
    %1159 = vmatpush1.bf16.msra.mxu0 0
    %1160 = vmatprep.subr.bf16.mxu0 0
    %1161 = vmatpush1.bf16.msra.mxu0 0
    %1162 = vmatprep.subr.bf16.mxu0 0
    %1163 = vmatpush1.bf16.msra.mxu0 0
    %1164 = vmatprep.subr.bf16.mxu0 0
    %1165 = vmatpush1.bf16.msra.mxu0 0
    %1166 = vmatprep.subr.bf16.mxu0 0
    %1167 = vmatpush1.bf16.msra.mxu0 0
    %1168 = vmatprep.subr.bf16.mxu0 0
    %1169 = vmatpush1.bf16.msra.mxu0 0
    %1170 = vmatprep.subr.bf16.mxu0 0
    %1171 = vmatpush1.bf16.msra.mxu0 0
    %1172 = vmatprep.subr.bf16.mxu0 0
    %1173 = vmatpush1.bf16.msra.mxu0 0
    %1174 = vmatprep.subr.bf16.mxu0 0
    %1175 = vmatpush1.bf16.msra.mxu0 0
    %1176 = vmatprep.subr.bf16.mxu0 0
    %1177 = vmatpush1.bf16.msra.mxu0 0
    %1178 = vmatprep.subr.bf16.mxu0 0
    %1179 = vmatpush1.bf16.msra.mxu0 0
    %1180 = vmatprep.subr.bf16.mxu0 0
    %1181 = vmatpush1.bf16.msra.mxu0 0
    %1182 = vmatprep.subr.bf16.mxu0 0
    %1183 = vmatpush1.bf16.msra.mxu0 0
    %1184 = vmatprep.mubr.bf16.mxu0 0
    %1185 = vmatmul.mubr.bf16.gmra.mrb[0].mxu0 %v1129
    %v1186 = vpop.f32.mrb[0].mxu0
    %v1187 = vadd.f32 0.0, %v1186
    %v1188 = vpop.f32.mrb[0].mxu0
    %v1189 = vadd.f32 0.0, %v1188
    %v1190 = vpop.f32.mrb[0].mxu0
    %v1191 = vadd.f32 0.0, %v1190
    %v1192 = vpop.f32.mrb[0].mxu0
    %v1193 = vadd.f32 0.0, %v1192
    %1194 = vmatprep.mubr.bf16.mxu0 0
    %1195 = vmatmul.mubr.bf16.gmra.mrb[0].mxu0 %v1132
    %v1196 = vpop.f32.mrb[0].mxu0
    %v1197 = vadd.f32 0.0, %v1196
    %v1198 = vpop.f32.mrb[0].mxu0
    %v1199 = vadd.f32 0.0, %v1198
    %v1200 = vpop.f32.mrb[0].mxu0
    %v1201 = vadd.f32 0.0, %v1200
    %v1202 = vpop.f32.mrb[0].mxu0
    %v1203 = vadd.f32 0.0, %v1202
    %1204 = vmatprep.mubr.bf16.mxu0 0
    %1205 = vmatmul.mubr.bf16.gmra.mrb[0].mxu0 %v1135
    %v1206 = vpop.f32.mrb[0].mxu0
    %v1207 = vadd.f32 0.0, %v1206
    %v1208 = vpop.f32.mrb[0].mxu0
    %v1209 = vadd.f32 0.0, %v1208
    %v1210 = vpop.f32.mrb[0].mxu0
    %v1211 = vadd.f32 0.0, %v1210
    %v1212 = vpop.f32.mrb[0].mxu0
    %v1213 = vadd.f32 0.0, %v1212
    %1214 = vmatprep.mubr.bf16.mxu0 0
    %1215 = vmatmul.mubr.bf16.gmra.mrb[0].mxu0 %v1138
    %v1216 = vpop.f32.mrb[0].mxu0
    %v1217 = vadd.f32 0.0, %v1216
    %v1218 = vpop.f32.mrb[0].mxu0
    %v1219 = vadd.f32 0.0, %v1218
    %v1220 = vpop.f32.mrb[0].mxu0
    %v1221 = vadd.f32 0.0, %v1220
    %v1222 = vpop.f32.mrb[0].mxu0
    %v1223 = vadd.f32 0.0, %v1222
    %1224 = vmatprep.mubr.bf16.mxu0 0
    %1225 = vmatmul.mubr.bf16.gmra.mrb[0].mxu0 %v1141
    %v1226 = vpop.f32.mrb[0].mxu0
    %v1227 = vadd.f32 0.0, %v1226
    %v1228 = vpop.f32.mrb[0].mxu0
    %v1229 = vadd.f32 0.0, %v1228
    %v1230 = vpop.f32.mrb[0].mxu0
    %v1231 = vadd.f32 0.0, %v1230
    %v1232 = vpop.f32.mrb[0].mxu0
    %v1233 = vadd.f32 0.0, %v1232
    %1234 = vmatprep.mubr.bf16.mxu0 0
    %1235 = vmatmul.mubr.bf16.gmra.mrb[0].mxu0 %v1144
    %v1236 = vpop.f32.mrb[0].mxu0
    %v1237 = vadd.f32 0.0, %v1236
    %v1238 = vpop.f32.mrb[0].mxu0
    %v1239 = vadd.f32 0.0, %v1238
    %v1240 = vpop.f32.mrb[0].mxu0
    %v1241 = vadd.f32 0.0, %v1240
    %v1242 = vpop.f32.mrb[0].mxu0
    %v1243 = vadd.f32 0.0, %v1242
    %1244 = vmatprep.mubr.bf16.mxu0 0
    %1245 = vmatmul.mubr.bf16.gmra.mrb[0].mxu0 %v1147
    %v1246 = vpop.f32.mrb[0].mxu0
    %v1247 = vadd.f32 0.0, %v1246
    %v1248 = vpop.f32.mrb[0].mxu0
    %v1249 = vadd.f32 0.0, %v1248
    %v1250 = vpop.f32.mrb[0].mxu0
    %v1251 = vadd.f32 0.0, %v1250
    %v1252 = vpop.f32.mrb[0].mxu0
    %v1253 = vadd.f32 0.0, %v1252
    %1254 = vmatprep.mubr.bf16.mxu0 0
    %1255 = vmatmul.mubr.bf16.gmra.mrb[0].mxu0 %v1150
    %v1256 = vpop.f32.mrb[0].mxu0
    %v1257 = vadd.f32 0.0, %v1256
    %v1258 = vpop.f32.mrb[0].mxu0
    %v1259 = vadd.f32 0.0, %v1258
    %v1260 = vpop.f32.mrb[0].mxu0
    %v1261 = vadd.f32 0.0, %v1260
    %v1262 = vpop.f32.mrb[0].mxu0
    %v1263 = vadd.f32 0.0, %v1262
    %1264 = vdwg.mxu0
    %1265 = vmatprep.subr.bf16.mxu0 %v662
    %1266 = vmatpush1.bf16.msra.mxu0 %v659
    %1267 = vmatprep.subr.bf16.mxu0 0
    %1268 = vmatpush1.bf16.msra.mxu0 0
    %1269 = vmatprep.subr.bf16.mxu0 0
    %1270 = vmatpush1.bf16.msra.mxu0 0
    %1271 = vmatprep.subr.bf16.mxu0 0
    %1272 = vmatpush1.bf16.msra.mxu0 0
    %1273 = vmatprep.subr.bf16.mxu0 0
    %1274 = vmatpush1.bf16.msra.mxu0 0
    %1275 = vmatprep.subr.bf16.mxu0 0
    %1276 = vmatpush1.bf16.msra.mxu0 0
    %1277 = vmatprep.subr.bf16.mxu0 0
    %1278 = vmatpush1.bf16.msra.mxu0 0
    %1279 = vmatprep.subr.bf16.mxu0 0
    %1280 = vmatpush1.bf16.msra.mxu0 0
    %1281 = vmatprep.subr.bf16.mxu0 0
    %1282 = vmatpush1.bf16.msra.mxu0 0
    %1283 = vmatprep.subr.bf16.mxu0 0
    %1284 = vmatpush1.bf16.msra.mxu0 0
    %1285 = vmatprep.subr.bf16.mxu0 0
    %1286 = vmatpush1.bf16.msra.mxu0 0
    %1287 = vmatprep.subr.bf16.mxu0 0
    %1288 = vmatpush1.bf16.msra.mxu0 0
    %1289 = vmatprep.subr.bf16.mxu0 0
    %1290 = vmatpush1.bf16.msra.mxu0 0
    %1291 = vmatprep.subr.bf16.mxu0 0
    %1292 = vmatpush1.bf16.msra.mxu0 0
    %1293 = vmatprep.subr.bf16.mxu0 0
    %1294 = vmatpush1.bf16.msra.mxu0 0
    %1295 = vmatprep.subr.bf16.mxu0 0
    %1296 = vmatpush1.bf16.msra.mxu0 0
    %1297 = vmatprep.mubr.bf16.mxu0 0
    %1298 = vmatmul.mubr.bf16.gmra.mrb[0].mxu0 %v1129
    %v1299 = vpop.f32.mrb[0].mxu0
    %v1300 = vadd.f32 0.0, %v1299
    %v1301 = vpop.f32.mrb[0].mxu0
    %v1302 = vadd.f32 0.0, %v1301
    %v1303 = vpop.f32.mrb[0].mxu0
    %v1304 = vadd.f32 0.0, %v1303
    %v1305 = vpop.f32.mrb[0].mxu0
    %v1306 = vadd.f32 0.0, %v1305
    %1307 = vmatprep.mubr.bf16.mxu0 0
    %1308 = vmatmul.mubr.bf16.gmra.mrb[0].mxu0 %v1132
    %v1309 = vpop.f32.mrb[0].mxu0
    %v1310 = vadd.f32 0.0, %v1309
    %v1311 = vpop.f32.mrb[0].mxu0
    %v1312 = vadd.f32 0.0, %v1311
    %v1313 = vpop.f32.mrb[0].mxu0
    %v1314 = vadd.f32 0.0, %v1313
    %v1315 = vpop.f32.mrb[0].mxu0
    %v1316 = vadd.f32 0.0, %v1315
    %1317 = vmatprep.mubr.bf16.mxu0 0
    %1318 = vmatmul.mubr.bf16.gmra.mrb[0].mxu0 %v1135
    %v1319 = vpop.f32.mrb[0].mxu0
    %v1320 = vadd.f32 0.0, %v1319
    %v1321 = vpop.f32.mrb[0].mxu0
    %v1322 = vadd.f32 0.0, %v1321
    %v1323 = vpop.f32.mrb[0].mxu0
    %v1324 = vadd.f32 0.0, %v1323
    %v1325 = vpop.f32.mrb[0].mxu0
    %v1326 = vadd.f32 0.0, %v1325
    %1327 = vmatprep.mubr.bf16.mxu0 0
    %1328 = vmatmul.mubr.bf16.gmra.mrb[0].mxu0 %v1138
    %v1329 = vpop.f32.mrb[0].mxu0
    %v1330 = vadd.f32 0.0, %v1329
    %v1331 = vpop.f32.mrb[0].mxu0
    %v1332 = vadd.f32 0.0, %v1331
    %v1333 = vpop.f32.mrb[0].mxu0
    %v1334 = vadd.f32 0.0, %v1333
    %v1335 = vpop.f32.mrb[0].mxu0
    %v1336 = vadd.f32 0.0, %v1335
    %1337 = vmatprep.mubr.bf16.mxu0 0
    %1338 = vmatmul.mubr.bf16.gmra.mrb[0].mxu0 %v1141
    %v1339 = vpop.f32.mrb[0].mxu0
    %v1340 = vadd.f32 0.0, %v1339
    %v1341 = vpop.f32.mrb[0].mxu0
    %v1342 = vadd.f32 0.0, %v1341
    %v1343 = vpop.f32.mrb[0].mxu0
    %v1344 = vadd.f32 0.0, %v1343
    %v1345 = vpop.f32.mrb[0].mxu0
    %v1346 = vadd.f32 0.0, %v1345
    %1347 = vmatprep.mubr.bf16.mxu0 0
    %1348 = vmatmul.mubr.bf16.gmra.mrb[0].mxu0 %v1144
    %v1349 = vpop.f32.mrb[0].mxu0
    %v1350 = vadd.f32 0.0, %v1349
    %v1351 = vpop.f32.mrb[0].mxu0
    %v1352 = vadd.f32 0.0, %v1351
    %v1353 = vpop.f32.mrb[0].mxu0
    %v1354 = vadd.f32 0.0, %v1353
    %v1355 = vpop.f32.mrb[0].mxu0
    %v1356 = vadd.f32 0.0, %v1355
    %1357 = vmatprep.mubr.bf16.mxu0 0
    %1358 = vmatmul.mubr.bf16.gmra.mrb[0].mxu0 %v1147
    %v1359 = vpop.f32.mrb[0].mxu0
    %v1360 = vadd.f32 0.0, %v1359
    %v1361 = vpop.f32.mrb[0].mxu0
    %v1362 = vadd.f32 0.0, %v1361
    %v1363 = vpop.f32.mrb[0].mxu0
    %v1364 = vadd.f32 0.0, %v1363
    %v1365 = vpop.f32.mrb[0].mxu0
    %v1366 = vadd.f32 0.0, %v1365
    %1367 = vmatprep.mubr.bf16.mxu0 0
    %1368 = vmatmul.mubr.bf16.gmra.mrb[0].mxu0 %v1150
    %v1369 = vpop.f32.mrb[0].mxu0
    %v1370 = vadd.f32 0.0, %v1369
    %v1371 = vpop.f32.mrb[0].mxu0
    %v1372 = vadd.f32 0.0, %v1371
    %v1373 = vpop.f32.mrb[0].mxu0
    %v1374 = vadd.f32 0.0, %v1373
    %v1375 = vpop.f32.mrb[0].mxu0
    %v1376 = vadd.f32 0.0, %v1375
    %1377 = vdwg.mxu0
    %1378 = vmatprep.subr.bf16.mxu0 %v668
    %1379 = vmatpush1.bf16.msra.mxu0 %v665
    %1380 = vmatprep.subr.bf16.mxu0 0
    %1381 = vmatpush1.bf16.msra.mxu0 0
    %1382 = vmatprep.subr.bf16.mxu0 0
    %1383 = vmatpush1.bf16.msra.mxu0 0
    %1384 = vmatprep.subr.bf16.mxu0 0
    %1385 = vmatpush1.bf16.msra.mxu0 0
    %1386 = vmatprep.subr.bf16.mxu0 0
    %1387 = vmatpush1.bf16.msra.mxu0 0
    %1388 = vmatprep.subr.bf16.mxu0 0
    %1389 = vmatpush1.bf16.msra.mxu0 0
    %1390 = vmatprep.subr.bf16.mxu0 0
    %1391 = vmatpush1.bf16.msra.mxu0 0
    %1392 = vmatprep.subr.bf16.mxu0 0
    %1393 = vmatpush1.bf16.msra.mxu0 0
    %1394 = vmatprep.subr.bf16.mxu0 0
    %1395 = vmatpush1.bf16.msra.mxu0 0
    %1396 = vmatprep.subr.bf16.mxu0 0
    %1397 = vmatpush1.bf16.msra.mxu0 0
    %1398 = vmatprep.subr.bf16.mxu0 0
    %1399 = vmatpush1.bf16.msra.mxu0 0
    %1400 = vmatprep.subr.bf16.mxu0 0
    %1401 = vmatpush1.bf16.msra.mxu0 0
    %1402 = vmatprep.subr.bf16.mxu0 0
    %1403 = vmatpush1.bf16.msra.mxu0 0
    %1404 = vmatprep.subr.bf16.mxu0 0
    %1405 = vmatpush1.bf16.msra.mxu0 0
    %1406 = vmatprep.subr.bf16.mxu0 0
    %1407 = vmatpush1.bf16.msra.mxu0 0
    %1408 = vmatprep.subr.bf16.mxu0 0
    %1409 = vmatpush1.bf16.msra.mxu0 0
    %1410 = vmatprep.mubr.bf16.mxu0 0
    %1411 = vmatmul.mubr.bf16.gmra.mrb[0].mxu0 %v1129
    %v1412 = vpop.f32.mrb[0].mxu0
    %v1413 = vadd.f32 0.0, %v1412
    %v1414 = vpop.f32.mrb[0].mxu0
    %v1415 = vadd.f32 0.0, %v1414
    %v1416 = vpop.f32.mrb[0].mxu0
    %v1417 = vadd.f32 0.0, %v1416
    %v1418 = vpop.f32.mrb[0].mxu0
    %v1419 = vadd.f32 0.0, %v1418
    %1420 = vmatprep.mubr.bf16.mxu0 0
    %1421 = vmatmul.mubr.bf16.gmra.mrb[0].mxu0 %v1132
    %v1422 = vpop.f32.mrb[0].mxu0
    %v1423 = vadd.f32 0.0, %v1422
    %v1424 = vpop.f32.mrb[0].mxu0
    %v1425 = vadd.f32 0.0, %v1424
    %v1426 = vpop.f32.mrb[0].mxu0
    %v1427 = vadd.f32 0.0, %v1426
    %v1428 = vpop.f32.mrb[0].mxu0
    %v1429 = vadd.f32 0.0, %v1428
    %1430 = vmatprep.mubr.bf16.mxu0 0
    %1431 = vmatmul.mubr.bf16.gmra.mrb[0].mxu0 %v1135
    %v1432 = vpop.f32.mrb[0].mxu0
    %v1433 = vadd.f32 0.0, %v1432
    %v1434 = vpop.f32.mrb[0].mxu0
    %v1435 = vadd.f32 0.0, %v1434
    %v1436 = vpop.f32.mrb[0].mxu0
    %v1437 = vadd.f32 0.0, %v1436
    %v1438 = vpop.f32.mrb[0].mxu0
    %v1439 = vadd.f32 0.0, %v1438
    %1440 = vmatprep.mubr.bf16.mxu0 0
    %1441 = vmatmul.mubr.bf16.gmra.mrb[0].mxu0 %v1138
    %v1442 = vpop.f32.mrb[0].mxu0
    %v1443 = vadd.f32 0.0, %v1442
    %v1444 = vpop.f32.mrb[0].mxu0
    %v1445 = vadd.f32 0.0, %v1444
    %v1446 = vpop.f32.mrb[0].mxu0
    %v1447 = vadd.f32 0.0, %v1446
    %v1448 = vpop.f32.mrb[0].mxu0
    %v1449 = vadd.f32 0.0, %v1448
    %1450 = vmatprep.mubr.bf16.mxu0 0
    %1451 = vmatmul.mubr.bf16.gmra.mrb[0].mxu0 %v1141
    %v1452 = vpop.f32.mrb[0].mxu0
    %v1453 = vadd.f32 0.0, %v1452
    %v1454 = vpop.f32.mrb[0].mxu0
    %v1455 = vadd.f32 0.0, %v1454
    %v1456 = vpop.f32.mrb[0].mxu0
    %v1457 = vadd.f32 0.0, %v1456
    %v1458 = vpop.f32.mrb[0].mxu0
    %v1459 = vadd.f32 0.0, %v1458
    %1460 = vmatprep.mubr.bf16.mxu0 0
    %1461 = vmatmul.mubr.bf16.gmra.mrb[0].mxu0 %v1144
    %v1462 = vpop.f32.mrb[0].mxu0
    %v1463 = vadd.f32 0.0, %v1462
    %v1464 = vpop.f32.mrb[0].mxu0
    %v1465 = vadd.f32 0.0, %v1464
    %v1466 = vpop.f32.mrb[0].mxu0
    %v1467 = vadd.f32 0.0, %v1466
    %v1468 = vpop.f32.mrb[0].mxu0
    %v1469 = vadd.f32 0.0, %v1468
    %1470 = vmatprep.mubr.bf16.mxu0 0
    %1471 = vmatmul.mubr.bf16.gmra.mrb[0].mxu0 %v1147
    %v1472 = vpop.f32.mrb[0].mxu0
    %v1473 = vadd.f32 0.0, %v1472
    %v1474 = vpop.f32.mrb[0].mxu0
    %v1475 = vadd.f32 0.0, %v1474
    %v1476 = vpop.f32.mrb[0].mxu0
    %v1477 = vadd.f32 0.0, %v1476
    %v1478 = vpop.f32.mrb[0].mxu0
    %v1479 = vadd.f32 0.0, %v1478
    %1480 = vmatprep.mubr.bf16.mxu0 0
    %1481 = vmatmul.mubr.bf16.gmra.mrb[0].mxu0 %v1150
    %v1482 = vpop.f32.mrb[0].mxu0
    %v1483 = vadd.f32 0.0, %v1482
    %v1484 = vpop.f32.mrb[0].mxu0
    %v1485 = vadd.f32 0.0, %v1484
    %v1486 = vpop.f32.mrb[0].mxu0
    %v1487 = vadd.f32 0.0, %v1486
    %v1488 = vpop.f32.mrb[0].mxu0
    %v1489 = vadd.f32 0.0, %v1488
    %1490 = vdwg.mxu0
    %1491 = vmatprep.subr.bf16.mxu0 %v674
    %1492 = vmatpush1.bf16.msra.mxu0 %v671
    %1493 = vmatprep.subr.bf16.mxu0 0
    %1494 = vmatpush1.bf16.msra.mxu0 0
    %1495 = vmatprep.subr.bf16.mxu0 0
    %1496 = vmatpush1.bf16.msra.mxu0 0
    %1497 = vmatprep.subr.bf16.mxu0 0
    %1498 = vmatpush1.bf16.msra.mxu0 0
    %1499 = vmatprep.subr.bf16.mxu0 0
    %1500 = vmatpush1.bf16.msra.mxu0 0
    %1501 = vmatprep.subr.bf16.mxu0 0
    %1502 = vmatpush1.bf16.msra.mxu0 0
    %1503 = vmatprep.subr.bf16.mxu0 0
    %1504 = vmatpush1.bf16.msra.mxu0 0
    %1505 = vmatprep.subr.bf16.mxu0 0
    %1506 = vmatpush1.bf16.msra.mxu0 0
    %1507 = vmatprep.subr.bf16.mxu0 0
    %1508 = vmatpush1.bf16.msra.mxu0 0
    %1509 = vmatprep.subr.bf16.mxu0 0
    %1510 = vmatpush1.bf16.msra.mxu0 0
    %1511 = vmatprep.subr.bf16.mxu0 0
    %1512 = vmatpush1.bf16.msra.mxu0 0
    %1513 = vmatprep.subr.bf16.mxu0 0
    %1514 = vmatpush1.bf16.msra.mxu0 0
    %1515 = vmatprep.subr.bf16.mxu0 0
    %1516 = vmatpush1.bf16.msra.mxu0 0
    %1517 = vmatprep.subr.bf16.mxu0 0
    %1518 = vmatpush1.bf16.msra.mxu0 0
    %1519 = vmatprep.subr.bf16.mxu0 0
    %1520 = vmatpush1.bf16.msra.mxu0 0
    %1521 = vmatprep.subr.bf16.mxu0 0
    %1522 = vmatpush1.bf16.msra.mxu0 0
    %1523 = vmatprep.mubr.bf16.mxu0 0
    %1524 = vmatmul.mubr.bf16.gmra.mrb[0].mxu0 %v1129
    %v1525 = vpop.f32.mrb[0].mxu0
    %v1526 = vadd.f32 0.0, %v1525
    %v1527 = vpop.f32.mrb[0].mxu0
    %v1528 = vadd.f32 0.0, %v1527
    %v1529 = vpop.f32.mrb[0].mxu0
    %v1530 = vadd.f32 0.0, %v1529
    %v1531 = vpop.f32.mrb[0].mxu0
    %v1532 = vadd.f32 0.0, %v1531
    %1533 = vmatprep.mubr.bf16.mxu0 0
    %1534 = vmatmul.mubr.bf16.gmra.mrb[0].mxu0 %v1132
    %v1535 = vpop.f32.mrb[0].mxu0
    %v1536 = vadd.f32 0.0, %v1535
    %v1537 = vpop.f32.mrb[0].mxu0
    %v1538 = vadd.f32 0.0, %v1537
    %v1539 = vpop.f32.mrb[0].mxu0
    %v1540 = vadd.f32 0.0, %v1539
    %v1541 = vpop.f32.mrb[0].mxu0
    %v1542 = vadd.f32 0.0, %v1541
    %1543 = vmatprep.mubr.bf16.mxu0 0
    %1544 = vmatmul.mubr.bf16.gmra.mrb[0].mxu0 %v1135
    %v1545 = vpop.f32.mrb[0].mxu0
    %v1546 = vadd.f32 0.0, %v1545
    %v1547 = vpop.f32.mrb[0].mxu0
    %v1548 = vadd.f32 0.0, %v1547
    %v1549 = vpop.f32.mrb[0].mxu0
    %v1550 = vadd.f32 0.0, %v1549
    %v1551 = vpop.f32.mrb[0].mxu0
    %v1552 = vadd.f32 0.0, %v1551
    %1553 = vmatprep.mubr.bf16.mxu0 0
    %1554 = vmatmul.mubr.bf16.gmra.mrb[0].mxu0 %v1138
    %v1555 = vpop.f32.mrb[0].mxu0
    %v1556 = vadd.f32 0.0, %v1555
    %v1557 = vpop.f32.mrb[0].mxu0
    %v1558 = vadd.f32 0.0, %v1557
    %v1559 = vpop.f32.mrb[0].mxu0
    %v1560 = vadd.f32 0.0, %v1559
    %v1561 = vpop.f32.mrb[0].mxu0
    %v1562 = vadd.f32 0.0, %v1561
    %1563 = vmatprep.mubr.bf16.mxu0 0
    %1564 = vmatmul.mubr.bf16.gmra.mrb[0].mxu0 %v1141
    %v1565 = vpop.f32.mrb[0].mxu0
    %v1566 = vadd.f32 0.0, %v1565
    %v1567 = vpop.f32.mrb[0].mxu0
    %v1568 = vadd.f32 0.0, %v1567
    %v1569 = vpop.f32.mrb[0].mxu0
    %v1570 = vadd.f32 0.0, %v1569
    %v1571 = vpop.f32.mrb[0].mxu0
    %v1572 = vadd.f32 0.0, %v1571
    %1573 = vmatprep.mubr.bf16.mxu0 0
    %1574 = vmatmul.mubr.bf16.gmra.mrb[0].mxu0 %v1144
    %v1575 = vpop.f32.mrb[0].mxu0
    %v1576 = vadd.f32 0.0, %v1575
    %v1577 = vpop.f32.mrb[0].mxu0
    %v1578 = vadd.f32 0.0, %v1577
    %v1579 = vpop.f32.mrb[0].mxu0
    %v1580 = vadd.f32 0.0, %v1579
    %v1581 = vpop.f32.mrb[0].mxu0
    %v1582 = vadd.f32 0.0, %v1581
    %1583 = vmatprep.mubr.bf16.mxu0 0
    %1584 = vmatmul.mubr.bf16.gmra.mrb[0].mxu0 %v1147
    %v1585 = vpop.f32.mrb[0].mxu0
    %v1586 = vadd.f32 0.0, %v1585
    %v1587 = vpop.f32.mrb[0].mxu0
    %v1588 = vadd.f32 0.0, %v1587
    %v1589 = vpop.f32.mrb[0].mxu0
    %v1590 = vadd.f32 0.0, %v1589
    %v1591 = vpop.f32.mrb[0].mxu0
    %v1592 = vadd.f32 0.0, %v1591
    %1593 = vmatprep.mubr.bf16.mxu0 0
    %1594 = vmatmul.mubr.bf16.gmra.mrb[0].mxu0 %v1150
    %v1595 = vpop.f32.mrb[0].mxu0
    %v1596 = vadd.f32 0.0, %v1595
    %v1597 = vpop.f32.mrb[0].mxu0
    %v1598 = vadd.f32 0.0, %v1597
    %v1599 = vpop.f32.mrb[0].mxu0
    %v1600 = vadd.f32 0.0, %v1599
    %v1601 = vpop.f32.mrb[0].mxu0
    %v1602 = vadd.f32 0.0, %v1601
    %1603 = vdwg.mxu0
    %v1604 = vadd.f32 %v711, %v1187
    %v1605 = vadd.f32 %v713, %v1189
    %v1606 = vadd.f32 %v824, %v1300
    %v1607 = vadd.f32 %v826, %v1302
    %v1608 = vadd.f32 %v937, %v1413
    %v1609 = vadd.f32 %v939, %v1415
    %v1610 = vadd.f32 %v1050, %v1526
    %v1611 = vadd.f32 %v1052, %v1528
    %v1612 = vadd.f32 %v715, %v1191
    %v1613 = vadd.f32 %v717, %v1193
    %v1614 = vadd.f32 %v828, %v1304
    %v1615 = vadd.f32 %v830, %v1306
    %v1616 = vadd.f32 %v941, %v1417
    %v1617 = vadd.f32 %v943, %v1419
    %v1618 = vadd.f32 %v1054, %v1530
    %v1619 = vadd.f32 %v1056, %v1532
    %v1620 = vadd.f32 %v721, %v1197
    %v1621 = vadd.f32 %v723, %v1199
    %v1622 = vadd.f32 %v834, %v1310
    %v1623 = vadd.f32 %v836, %v1312
    %v1624 = vadd.f32 %v947, %v1423
    %v1625 = vadd.f32 %v949, %v1425
    %v1626 = vadd.f32 %v1060, %v1536
    %v1627 = vadd.f32 %v1062, %v1538
    %v1628 = vadd.f32 %v725, %v1201
    %v1629 = vadd.f32 %v727, %v1203
    %v1630 = vadd.f32 %v838, %v1314
    %v1631 = vadd.f32 %v840, %v1316
    %v1632 = vadd.f32 %v951, %v1427
    %v1633 = vadd.f32 %v953, %v1429
    %v1634 = vadd.f32 %v1064, %v1540
    %v1635 = vadd.f32 %v1066, %v1542
    %v1636 = vadd.f32 %v731, %v1207
    %v1637 = vadd.f32 %v733, %v1209
    %v1638 = vadd.f32 %v844, %v1320
    %v1639 = vadd.f32 %v846, %v1322
    %v1640 = vadd.f32 %v957, %v1433
    %v1641 = vadd.f32 %v959, %v1435
    %v1642 = vadd.f32 %v1070, %v1546
    %v1643 = vadd.f32 %v1072, %v1548
    %v1644 = vadd.f32 %v735, %v1211
    %v1645 = vadd.f32 %v737, %v1213
    %v1646 = vadd.f32 %v848, %v1324
    %v1647 = vadd.f32 %v850, %v1326
    %v1648 = vadd.f32 %v961, %v1437
    %v1649 = vadd.f32 %v963, %v1439
    %v1650 = vadd.f32 %v1074, %v1550
    %v1651 = vadd.f32 %v1076, %v1552
    %v1652 = vadd.f32 %v741, %v1217
    %v1653 = vadd.f32 %v743, %v1219
    %v1654 = vadd.f32 %v854, %v1330
    %v1655 = vadd.f32 %v856, %v1332
    %v1656 = vadd.f32 %v967, %v1443
    %v1657 = vadd.f32 %v969, %v1445
    %v1658 = vadd.f32 %v1080, %v1556
    %v1659 = vadd.f32 %v1082, %v1558
    %v1660 = vadd.f32 %v745, %v1221
    %v1661 = vadd.f32 %v747, %v1223
    %v1662 = vadd.f32 %v858, %v1334
    %v1663 = vadd.f32 %v860, %v1336
    %v1664 = vadd.f32 %v971, %v1447
    %v1665 = vadd.f32 %v973, %v1449
    %v1666 = vadd.f32 %v1084, %v1560
    %v1667 = vadd.f32 %v1086, %v1562
    %v1668 = vadd.f32 %v751, %v1227
    %v1669 = vadd.f32 %v753, %v1229
    %v1670 = vadd.f32 %v864, %v1340
    %v1671 = vadd.f32 %v866, %v1342
    %v1672 = vadd.f32 %v977, %v1453
    %v1673 = vadd.f32 %v979, %v1455
    %v1674 = vadd.f32 %v1090, %v1566
    %v1675 = vadd.f32 %v1092, %v1568
    %v1676 = vadd.f32 %v755, %v1231
    %v1677 = vadd.f32 %v757, %v1233
    %v1678 = vadd.f32 %v868, %v1344
    %v1679 = vadd.f32 %v870, %v1346
    %v1680 = vadd.f32 %v981, %v1457
    %v1681 = vadd.f32 %v983, %v1459
    %v1682 = vadd.f32 %v1094, %v1570
    %v1683 = vadd.f32 %v1096, %v1572
    %v1684 = vadd.f32 %v761, %v1237
    %v1685 = vadd.f32 %v763, %v1239
    %v1686 = vadd.f32 %v874, %v1350
    %v1687 = vadd.f32 %v876, %v1352
    %v1688 = vadd.f32 %v987, %v1463
    %v1689 = vadd.f32 %v989, %v1465
    %v1690 = vadd.f32 %v1100, %v1576
    %v1691 = vadd.f32 %v1102, %v1578
    %v1692 = vadd.f32 %v765, %v1241
    %v1693 = vadd.f32 %v767, %v1243
    %v1694 = vadd.f32 %v878, %v1354
    %v1695 = vadd.f32 %v880, %v1356
    %v1696 = vadd.f32 %v991, %v1467
    %v1697 = vadd.f32 %v993, %v1469
    %v1698 = vadd.f32 %v1104, %v1580
    %v1699 = vadd.f32 %v1106, %v1582
    %v1700 = vadd.f32 %v771, %v1247
    %v1701 = vadd.f32 %v773, %v1249
    %v1702 = vadd.f32 %v884, %v1360
    %v1703 = vadd.f32 %v886, %v1362
    %v1704 = vadd.f32 %v997, %v1473
    %v1705 = vadd.f32 %v999, %v1475
    %v1706 = vadd.f32 %v1110, %v1586
    %v1707 = vadd.f32 %v1112, %v1588
    %v1708 = vadd.f32 %v775, %v1251
    %v1709 = vadd.f32 %v777, %v1253
    %v1710 = vadd.f32 %v888, %v1364
    %v1711 = vadd.f32 %v890, %v1366
    %v1712 = vadd.f32 %v1001, %v1477
    %v1713 = vadd.f32 %v1003, %v1479
    %v1714 = vadd.f32 %v1114, %v1590
    %v1715 = vadd.f32 %v1116, %v1592
    %v1716 = vadd.f32 %v781, %v1257
    %v1717 = vadd.f32 %v783, %v1259
    %v1718 = vadd.f32 %v894, %v1370
    %v1719 = vadd.f32 %v896, %v1372
    %v1720 = vadd.f32 %v1007, %v1483
    %v1721 = vadd.f32 %v1009, %v1485
    %v1722 = vadd.f32 %v1120, %v1596
    %v1723 = vadd.f32 %v1122, %v1598
    %v1724 = vadd.f32 %v785, %v1261
    %v1725 = vadd.f32 %v787, %v1263
    %v1726 = vadd.f32 %v898, %v1374
    %v1727 = vadd.f32 %v900, %v1376
    %v1728 = vadd.f32 %v1011, %v1487
    %v1729 = vadd.f32 %v1013, %v1489
    %v1730 = vadd.f32 %v1124, %v1600
    %v1731 = vadd.f32 %v1126, %v1602
    %v1732 = vmax.f32 %v1604, %v1606
    %v1733 = vmax.f32 %v1605, %v1607
    %v1734 = vmax.f32 %v1612, %v1614
    %v1735 = vmax.f32 %v1613, %v1615
    %v1736 = vmax.f32 %v1620, %v1622
    %v1737 = vmax.f32 %v1621, %v1623
    %v1738 = vmax.f32 %v1628, %v1630
    %v1739 = vmax.f32 %v1629, %v1631
    %v1740 = vmax.f32 %v1636, %v1638
    %v1741 = vmax.f32 %v1637, %v1639
    %v1742 = vmax.f32 %v1644, %v1646
    %v1743 = vmax.f32 %v1645, %v1647
    %v1744 = vmax.f32 %v1652, %v1654
    %v1745 = vmax.f32 %v1653, %v1655
    %v1746 = vmax.f32 %v1660, %v1662
    %v1747 = vmax.f32 %v1661, %v1663
    %v1748 = vmax.f32 %v1668, %v1670
    %v1749 = vmax.f32 %v1669, %v1671
    %v1750 = vmax.f32 %v1676, %v1678
    %v1751 = vmax.f32 %v1677, %v1679
    %v1752 = vmax.f32 %v1684, %v1686
    %v1753 = vmax.f32 %v1685, %v1687
    %v1754 = vmax.f32 %v1692, %v1694
    %v1755 = vmax.f32 %v1693, %v1695
    %v1756 = vmax.f32 %v1700, %v1702
    %v1757 = vmax.f32 %v1701, %v1703
    %v1758 = vmax.f32 %v1708, %v1710
    %v1759 = vmax.f32 %v1709, %v1711
    %v1760 = vmax.f32 %v1716, %v1718
    %v1761 = vmax.f32 %v1717, %v1719
    %v1762 = vmax.f32 %v1724, %v1726
    %v1763 = vmax.f32 %v1725, %v1727
    %v1764 = vmax.f32 %v1608, %v1610
    %v1765 = vmax.f32 %v1609, %v1611
    %v1766 = vmax.f32 %v1616, %v1618
    %v1767 = vmax.f32 %v1617, %v1619
    %v1768 = vmax.f32 %v1624, %v1626
    %v1769 = vmax.f32 %v1625, %v1627
    %v1770 = vmax.f32 %v1632, %v1634
    %v1771 = vmax.f32 %v1633, %v1635
    %v1772 = vmax.f32 %v1640, %v1642
    %v1773 = vmax.f32 %v1641, %v1643
    %v1774 = vmax.f32 %v1648, %v1650
    %v1775 = vmax.f32 %v1649, %v1651
    %v1776 = vmax.f32 %v1656, %v1658
    %v1777 = vmax.f32 %v1657, %v1659
    %v1778 = vmax.f32 %v1664, %v1666
    %v1779 = vmax.f32 %v1665, %v1667
    %v1780 = vmax.f32 %v1672, %v1674
    %v1781 = vmax.f32 %v1673, %v1675
    %v1782 = vmax.f32 %v1680, %v1682
    %v1783 = vmax.f32 %v1681, %v1683
    %v1784 = vmax.f32 %v1688, %v1690
    %v1785 = vmax.f32 %v1689, %v1691
    %v1786 = vmax.f32 %v1696, %v1698
    %v1787 = vmax.f32 %v1697, %v1699
    %v1788 = vmax.f32 %v1704, %v1706
    %v1789 = vmax.f32 %v1705, %v1707
    %v1790 = vmax.f32 %v1712, %v1714
    %v1791 = vmax.f32 %v1713, %v1715
    %v1792 = vmax.f32 %v1720, %v1722
    %v1793 = vmax.f32 %v1721, %v1723
    %v1794 = vmax.f32 %v1728, %v1730
    %v1795 = vmax.f32 %v1729, %v1731
    %v1796 = vmax.f32 %v1732, %v1764
    %v1797 = vmax.f32 %v1733, %v1765
    %v1798 = vmax.f32 %v1734, %v1766
    %v1799 = vmax.f32 %v1735, %v1767
    %v1800 = vmax.f32 %v1736, %v1768
    %v1801 = vmax.f32 %v1737, %v1769
    %v1802 = vmax.f32 %v1738, %v1770
    %v1803 = vmax.f32 %v1739, %v1771
    %v1804 = vmax.f32 %v1740, %v1772
    %v1805 = vmax.f32 %v1741, %v1773
    %v1806 = vmax.f32 %v1742, %v1774
    %v1807 = vmax.f32 %v1743, %v1775
    %v1808 = vmax.f32 %v1744, %v1776
    %v1809 = vmax.f32 %v1745, %v1777
    %v1810 = vmax.f32 %v1746, %v1778
    %v1811 = vmax.f32 %v1747, %v1779
    %v1812 = vmax.f32 %v1748, %v1780
    %v1813 = vmax.f32 %v1749, %v1781
    %v1814 = vmax.f32 %v1750, %v1782
    %v1815 = vmax.f32 %v1751, %v1783
    %v1816 = vmax.f32 %v1752, %v1784
    %v1817 = vmax.f32 %v1753, %v1785
    %v1818 = vmax.f32 %v1754, %v1786
    %v1819 = vmax.f32 %v1755, %v1787
    %v1820 = vmax.f32 %v1756, %v1788
    %v1821 = vmax.f32 %v1757, %v1789
    %v1822 = vmax.f32 %v1758, %v1790
    %v1823 = vmax.f32 %v1759, %v1791
    %v1824 = vmax.f32 %v1760, %v1792
    %v1825 = vmax.f32 %v1761, %v1793
    %v1826 = vmax.f32 %v1762, %v1794
    %v1827 = vmax.f32 %v1763, %v1795
    %v1828 = vld [vmem:[%s2] sm:$0xf]
    %v1829 = vpack.c.bf16 %v1828, %v1828
    %v1830 = vpack.c.bf16 %v1798, %v1796
    %v1831 = vpack.c.bf16 %v1799, %v1797
    %v1832 = vpack.c.bf16 %v1802, %v1800
    %v1833 = vpack.c.bf16 %v1803, %v1801
    %v1834 = vpack.c.bf16 %v1806, %v1804
    %v1835 = vpack.c.bf16 %v1807, %v1805
    %v1836 = vpack.c.bf16 %v1810, %v1808
    %v1837 = vpack.c.bf16 %v1811, %v1809
    %v1838 = vpack.c.bf16 %v1814, %v1812
    %v1839 = vpack.c.bf16 %v1815, %v1813
    %v1840 = vpack.c.bf16 %v1818, %v1816
    %v1841 = vpack.c.bf16 %v1819, %v1817
    %v1842 = vpack.c.bf16 %v1822, %v1820
    %v1843 = vpack.c.bf16 %v1823, %v1821
    %v1844 = vpack.c.bf16 %v1826, %v1824
    %v1845 = vpack.c.bf16 %v1827, %v1825
    %v1846 = vunpack.c.l.bf16 %v1829
    %v1847 = vsub.f32 %v1828, %v1846
    %v1848 = vpack.c.bf16 %v1847, %v1847
    %v1849 = vunpack.c.l.bf16 %v1830
    %v1850 = vunpack.c.l.bf16 %v1831
    %v1851 = vunpack.c.h.bf16 %v1830
    %v1852 = vunpack.c.h.bf16 %v1831
    %v1853 = vunpack.c.l.bf16 %v1832
    %v1854 = vunpack.c.l.bf16 %v1833
    %v1855 = vunpack.c.h.bf16 %v1832
    %v1856 = vunpack.c.h.bf16 %v1833
    %v1857 = vunpack.c.l.bf16 %v1834
    %v1858 = vunpack.c.l.bf16 %v1835
    %v1859 = vunpack.c.h.bf16 %v1834
    %v1860 = vunpack.c.h.bf16 %v1835
    %v1861 = vunpack.c.l.bf16 %v1836
    %v1862 = vunpack.c.l.bf16 %v1837
    %v1863 = vunpack.c.h.bf16 %v1836
    %v1864 = vunpack.c.h.bf16 %v1837
    %v1865 = vunpack.c.l.bf16 %v1838
    %v1866 = vunpack.c.l.bf16 %v1839
    %v1867 = vunpack.c.h.bf16 %v1838
    %v1868 = vunpack.c.h.bf16 %v1839
    %v1869 = vunpack.c.l.bf16 %v1840
    %v1870 = vunpack.c.l.bf16 %v1841
    %v1871 = vunpack.c.h.bf16 %v1840
    %v1872 = vunpack.c.h.bf16 %v1841
    %v1873 = vunpack.c.l.bf16 %v1842
    %v1874 = vunpack.c.l.bf16 %v1843
    %v1875 = vunpack.c.h.bf16 %v1842
    %v1876 = vunpack.c.h.bf16 %v1843
    %v1877 = vunpack.c.l.bf16 %v1844
    %v1878 = vunpack.c.l.bf16 %v1845
    %v1879 = vunpack.c.h.bf16 %v1844
    %v1880 = vunpack.c.h.bf16 %v1845
    %v1881 = vsub.f32 %v1796, %v1849
    %v1882 = vsub.f32 %v1797, %v1850
    %v1883 = vsub.f32 %v1798, %v1851
    %v1884 = vsub.f32 %v1799, %v1852
    %v1885 = vsub.f32 %v1800, %v1853
    %v1886 = vsub.f32 %v1801, %v1854
    %v1887 = vsub.f32 %v1802, %v1855
    %v1888 = vsub.f32 %v1803, %v1856
    %v1889 = vsub.f32 %v1804, %v1857
    %v1890 = vsub.f32 %v1805, %v1858
    %v1891 = vsub.f32 %v1806, %v1859
    %v1892 = vsub.f32 %v1807, %v1860
    %v1893 = vsub.f32 %v1808, %v1861
    %v1894 = vsub.f32 %v1809, %v1862
    %v1895 = vsub.f32 %v1810, %v1863
    %v1896 = vsub.f32 %v1811, %v1864
    %v1897 = vsub.f32 %v1812, %v1865
    %v1898 = vsub.f32 %v1813, %v1866
    %v1899 = vsub.f32 %v1814, %v1867
    %v1900 = vsub.f32 %v1815, %v1868
    %v1901 = vsub.f32 %v1816, %v1869
    %v1902 = vsub.f32 %v1817, %v1870
    %v1903 = vsub.f32 %v1818, %v1871
    %v1904 = vsub.f32 %v1819, %v1872
    %v1905 = vsub.f32 %v1820, %v1873
    %v1906 = vsub.f32 %v1821, %v1874
    %v1907 = vsub.f32 %v1822, %v1875
    %v1908 = vsub.f32 %v1823, %v1876
    %v1909 = vsub.f32 %v1824, %v1877
    %v1910 = vsub.f32 %v1825, %v1878
    %v1911 = vsub.f32 %v1826, %v1879
    %v1912 = vsub.f32 %v1827, %v1880
    %v1913 = vpack.c.bf16 %v1883, %v1881
    %v1914 = vpack.c.bf16 %v1884, %v1882
    %v1915 = vpack.c.bf16 %v1887, %v1885
    %v1916 = vpack.c.bf16 %v1888, %v1886
    %v1917 = vpack.c.bf16 %v1891, %v1889
    %v1918 = vpack.c.bf16 %v1892, %v1890
    %v1919 = vpack.c.bf16 %v1895, %v1893
    %v1920 = vpack.c.bf16 %v1896, %v1894
    %v1921 = vpack.c.bf16 %v1899, %v1897
    %v1922 = vpack.c.bf16 %v1900, %v1898
    %v1923 = vpack.c.bf16 %v1903, %v1901
    %v1924 = vpack.c.bf16 %v1904, %v1902
    %v1925 = vpack.c.bf16 %v1907, %v1905
    %v1926 = vpack.c.bf16 %v1908, %v1906
    %v1927 = vpack.c.bf16 %v1911, %v1909
    %v1928 = vpack.c.bf16 %v1912, %v1910
    %1929 = vmatprep.subr.bf16.mxu0 %v1914
    %1930 = vmatpush1.bf16.msra.mxu0 %v1913
    %1931 = vmatprep.subr.bf16.mxu0 %v1916
    %1932 = vmatpush1.bf16.msra.mxu0 %v1915
    %1933 = vmatprep.subr.bf16.mxu0 %v1918
    %1934 = vmatpush1.bf16.msra.mxu0 %v1917
    %1935 = vmatprep.subr.bf16.mxu0 %v1920
    %1936 = vmatpush1.bf16.msra.mxu0 %v1919
    %1937 = vmatprep.subr.bf16.mxu0 %v1922
    %1938 = vmatpush1.bf16.msra.mxu0 %v1921
    %1939 = vmatprep.subr.bf16.mxu0 %v1924
    %1940 = vmatpush1.bf16.msra.mxu0 %v1923
    %1941 = vmatprep.subr.bf16.mxu0 %v1926
    %1942 = vmatpush1.bf16.msra.mxu0 %v1925
    %1943 = vmatprep.subr.bf16.mxu0 %v1928
    %1944 = vmatpush1.bf16.msra.mxu0 %v1927
    %1945 = vmatprep.subr.bf16.mxu0 0
    %1946 = vmatpush1.bf16.msra.mxu0 0
    %1947 = vmatprep.subr.bf16.mxu0 0
    %1948 = vmatpush1.bf16.msra.mxu0 0
    %1949 = vmatprep.subr.bf16.mxu0 0
    %1950 = vmatpush1.bf16.msra.mxu0 0
    %1951 = vmatprep.subr.bf16.mxu0 0
    %1952 = vmatpush1.bf16.msra.mxu0 0
    %1953 = vmatprep.subr.bf16.mxu0 0
    %1954 = vmatpush1.bf16.msra.mxu0 0
    %1955 = vmatprep.subr.bf16.mxu0 0
    %1956 = vmatpush1.bf16.msra.mxu0 0
    %1957 = vmatprep.subr.bf16.mxu0 0
    %1958 = vmatpush1.bf16.msra.mxu0 0
    %1959 = vmatprep.subr.bf16.mxu0 0
    %1960 = vmatpush1.bf16.msra.mxu0 0
    %1961 = vmatprep.mubr.bf16.mxu0 0
    %1962 = vmatmul.mubr.bf16.gmra.mrb[0].mxu0 %v1829
    %v1963 = vpop.f32.mrb[0].mxu0
    %v1964 = vadd.f32 0.0, %v1963
    %v1965 = vpop.f32.mrb[0].mxu0
    %v1966 = vadd.f32 0.0, %v1965
    %v1967 = vpop.f32.mrb[0].mxu0
    %v1968 = vpop.f32.mrb[0].mxu0
    %1969 = vdwg.mxu0
    %1970 = vmatprep.subr.bf16.mxu0 %v1831
    %1971 = vmatpush1.bf16.msra.mxu0 %v1830
    %1972 = vmatprep.subr.bf16.mxu0 %v1833
    %1973 = vmatpush1.bf16.msra.mxu0 %v1832
    %1974 = vmatprep.subr.bf16.mxu0 %v1835
    %1975 = vmatpush1.bf16.msra.mxu0 %v1834
    %1976 = vmatprep.subr.bf16.mxu0 %v1837
    %1977 = vmatpush1.bf16.msra.mxu0 %v1836
    %1978 = vmatprep.subr.bf16.mxu0 %v1839
    %1979 = vmatpush1.bf16.msra.mxu0 %v1838
    %1980 = vmatprep.subr.bf16.mxu0 %v1841
    %1981 = vmatpush1.bf16.msra.mxu0 %v1840
    %1982 = vmatprep.subr.bf16.mxu0 %v1843
    %1983 = vmatpush1.bf16.msra.mxu0 %v1842
    %1984 = vmatprep.subr.bf16.mxu0 %v1845
    %1985 = vmatpush1.bf16.msra.mxu0 %v1844
    %1986 = vmatprep.subr.bf16.mxu0 0
    %1987 = vmatpush1.bf16.msra.mxu0 0
    %1988 = vmatprep.subr.bf16.mxu0 0
    %1989 = vmatpush1.bf16.msra.mxu0 0
    %1990 = vmatprep.subr.bf16.mxu0 0
    %1991 = vmatpush1.bf16.msra.mxu0 0
    %1992 = vmatprep.subr.bf16.mxu0 0
    %1993 = vmatpush1.bf16.msra.mxu0 0
    %1994 = vmatprep.subr.bf16.mxu0 0
    %1995 = vmatpush1.bf16.msra.mxu0 0
    %1996 = vmatprep.subr.bf16.mxu0 0
    %1997 = vmatpush1.bf16.msra.mxu0 0
    %1998 = vmatprep.subr.bf16.mxu0 0
    %1999 = vmatpush1.bf16.msra.mxu0 0
    %2000 = vmatprep.subr.bf16.mxu0 0
    %2001 = vmatpush1.bf16.msra.mxu0 0
    %2002 = vmatprep.mubr.bf16.mxu0 0
    %2003 = vmatmul.mubr.bf16.gmra.mrb[0].mxu0 %v1829
    %v2004 = vpop.f32.mrb[0].mxu0
    %v2005 = vadd.f32 %v1964, %v2004
    %v2006 = vpop.f32.mrb[0].mxu0
    %v2007 = vadd.f32 %v1966, %v2006
    %v2008 = vpop.f32.mrb[0].mxu0
    %v2009 = vpop.f32.mrb[0].mxu0
    %2010 = vdwg.mxu0
    %2011 = vmatprep.subr.bf16.mxu0 %v1831
    %2012 = vmatpush1.bf16.msra.mxu0 %v1830
    %2013 = vmatprep.subr.bf16.mxu0 %v1833
    %2014 = vmatpush1.bf16.msra.mxu0 %v1832
    %2015 = vmatprep.subr.bf16.mxu0 %v1835
    %2016 = vmatpush1.bf16.msra.mxu0 %v1834
    %2017 = vmatprep.subr.bf16.mxu0 %v1837
    %2018 = vmatpush1.bf16.msra.mxu0 %v1836
    %2019 = vmatprep.subr.bf16.mxu0 %v1839
    %2020 = vmatpush1.bf16.msra.mxu0 %v1838
    %2021 = vmatprep.subr.bf16.mxu0 %v1841
    %2022 = vmatpush1.bf16.msra.mxu0 %v1840
    %2023 = vmatprep.subr.bf16.mxu0 %v1843
    %2024 = vmatpush1.bf16.msra.mxu0 %v1842
    %2025 = vmatprep.subr.bf16.mxu0 %v1845
    %2026 = vmatpush1.bf16.msra.mxu0 %v1844
    %2027 = vmatprep.subr.bf16.mxu0 0
    %2028 = vmatpush1.bf16.msra.mxu0 0
    %2029 = vmatprep.subr.bf16.mxu0 0
    %2030 = vmatpush1.bf16.msra.mxu0 0
    %2031 = vmatprep.subr.bf16.mxu0 0
    %2032 = vmatpush1.bf16.msra.mxu0 0
    %2033 = vmatprep.subr.bf16.mxu0 0
    %2034 = vmatpush1.bf16.msra.mxu0 0
    %2035 = vmatprep.subr.bf16.mxu0 0
    %2036 = vmatpush1.bf16.msra.mxu0 0
    %2037 = vmatprep.subr.bf16.mxu0 0
    %2038 = vmatpush1.bf16.msra.mxu0 0
    %2039 = vmatprep.subr.bf16.mxu0 0
    %2040 = vmatpush1.bf16.msra.mxu0 0
    %2041 = vmatprep.subr.bf16.mxu0 0
    %2042 = vmatpush1.bf16.msra.mxu0 0
    %2043 = vmatprep.mubr.bf16.mxu0 0
    %2044 = vmatmul.mubr.bf16.gmra.mrb[0].mxu0 %v1848
    %v2045 = vpop.f32.mrb[0].mxu0
    %v2046 = vadd.f32 0.0, %v2045
    %v2047 = vpop.f32.mrb[0].mxu0
    %v2048 = vadd.f32 0.0, %v2047
    %v2049 = vpop.f32.mrb[0].mxu0
    %v2050 = vpop.f32.mrb[0].mxu0
    %2051 = vdwg.mxu0
    %v2052 = vadd.f32 %v2005, %v2046
    %v2053 = vadd.f32 %v2007, %v2048
    %v2054 = vld [vmem:[%s3] sm:$0xf]
    %2056 = vset.pattern.permute.xlu0 0
    %2057 = vperm.xlu0 %2056, %v2054
    %v2058 = vpop.permute.xlu0 %2057
    %v2060 = vadd.f32 %v2052, %v2058
    %v2061 = vadd.f32 %v2053, %v2058
    %v2062 = vlaneseq
    %v2063 = vand.u32 %v2062, 127
    %v2064 = vadd.s32 %v2063, 128
    %v2065 = vand.u32 %v2063, 127
    %v2066 = vand.u32 %v2064, 127
    %vm2067 = vcmp.lt.s32.totalorder %v2065, 49
    %vm2068 = vcmp.lt.s32.totalorder %v2066, 49
    %v2069 = vsel %vm2067, %v2060, 1.0
    %v2070 = vsel %vm2068, %v2061, 1.0
    %v2073 = vrot.slane %v2069, 1
    %v2074 = vrot.slane %v2070, 1
    %v2077 = vmul.f32 %v2069, %v2073
    %v2078 = vmul.f32 %v2070, %v2074
    %v2079 = vrot.slane %v2069, 2
    %v2080 = vrot.slane %v2070, 2
    %v2083 = vmul.f32 %v2077, %v2079
    %v2084 = vmul.f32 %v2078, %v2080
    %v2085 = vrot.slane %v2069, 3
    %v2086 = vrot.slane %v2070, 3
    %v2089 = vmul.f32 %v2083, %v2085
    %v2090 = vmul.f32 %v2084, %v2086
    %2091 = vrot.lane.b32.xlu0 %v2089, 1
    %v2092 = vpop.permute.xlu0 %2091
    %v2093 = vmul.f32 %v2089, %v2092
    %2094 = vrot.lane.b32.xlu0 %v2093, 2
    %v2095 = vpop.permute.xlu0 %2094
    %v2096 = vmul.f32 %v2093, %v2095
    %2097 = vrot.lane.b32.xlu0 %v2096, 4
    %v2098 = vpop.permute.xlu0 %2097
    %v2099 = vmul.f32 %v2096, %v2098
    %2100 = vrot.lane.b32.xlu0 %v2099, 8
    %v2101 = vpop.permute.xlu0 %2100
    %v2102 = vmul.f32 %v2099, %v2101
    %2103 = vrot.lane.b32.xlu0 %v2102, 16
    %v2104 = vpop.permute.xlu0 %2103
    %v2105 = vmul.f32 %v2102, %v2104
    %2106 = vrot.lane.b32.xlu0 %v2105, 32
    %v2107 = vpop.permute.xlu0 %2106
    %v2108 = vmul.f32 %v2105, %v2107
    %2109 = vrot.lane.b32.xlu0 %v2108, 64
    %v2110 = vpop.permute.xlu0 %2109
    %v2111 = vmul.f32 %v2108, %v2110
    %2112 = vrot.lane.b32.xlu0 %v2090, 1
    %v2113 = vpop.permute.xlu0 %2112
    %v2114 = vmul.f32 %v2090, %v2113
    %2115 = vrot.lane.b32.xlu0 %v2114, 2
    %v2116 = vpop.permute.xlu0 %2115
    %v2117 = vmul.f32 %v2114, %v2116
    %2118 = vrot.lane.b32.xlu0 %v2117, 4
    %v2119 = vpop.permute.xlu0 %2118
    %v2120 = vmul.f32 %v2117, %v2119
    %2121 = vrot.lane.b32.xlu0 %v2120, 8
    %v2122 = vpop.permute.xlu0 %2121
    %v2123 = vmul.f32 %v2120, %v2122
    %2124 = vrot.lane.b32.xlu0 %v2123, 16
    %v2125 = vpop.permute.xlu0 %2124
    %v2126 = vmul.f32 %v2123, %v2125
    %2127 = vrot.lane.b32.xlu0 %v2126, 32
    %v2128 = vpop.permute.xlu0 %2127
    %v2129 = vmul.f32 %v2126, %v2128
    %2130 = vrot.lane.b32.xlu0 %v2129, 64
    %v2131 = vpop.permute.xlu0 %2130
    %v2132 = vmul.f32 %v2129, %v2131
    %v2135 = vcombine.low %v2111, %v2132
    %v2137 = vunpack.c.l.s4 1966171168
    %v2138 = vunpack.c.0.s8 %v2137
    %v2139 = vlaneseq
    %v2140 = vshrl.u32 %v2139, 7
    %v2141 = vsub.s32 %v2138, %v2140
    %v2142 = vrot.slane %v2135, %v2141
    %v2144 = vunpack.c.l.s4 1966171168
    %v2145 = vunpack.c.0.s8 %v2144
    %v2146 = vlaneseq
    %v2147 = vshrl.u32 %v2146, 7
    %v2148 = vsub.s32 %v2145, %v2147
    %v2149 = vrot.slane %v2142, %v2148
    %v2151 = vlaneseq
    %vm2152 = vcmp.ge.s32.totalorder %v2151, 0
    %vm2153 = vcmp.lt.s32.totalorder %v2151, 256
    %vm2154 = vmand %vm2152, %vm2153
    %2155 = vst.msk [vmem:[#allocation2] sm:$0x3] %vm2154, %v2149
    // Predicated region
    $region18: #{tpu_custom_call.1} parent=1 // pred_check
      _
    $region19: #{tpu_custom_call.1} parent=1 // pred_check_branch
      %2157 = sbr.rel (0) target = $region21
    $region20: #{tpu_custom_call.1} parent=1 // pred_region
      %s2159 = ssub.s32 32, 32
      %2160 = vsyncadd [#allocation3], %s2159
      %s2162 = sshll.u32 [#allocation2], 4
      %s2163 = int_to_ptr.vmem [resolvable:$true] %s2162
      %2165 = dma.vmem_to_hbm [thread:$0]  %s2163, 32, %s4, [#allocation3]
    $region21: #{tpu_custom_call.1} parent=1 // pred_fallthru
      _
    // Predicated region
    $region22: #{tpu_custom_call.1} parent=1 // pred_check
      _
    $region23: #{tpu_custom_call.1} parent=1 // pred_check_branch
      %2167 = sbr.rel (0) target = $region25
    $region24: #{tpu_custom_call.1} parent=1 // pred_region
      %2168 = dma.done [#allocation3], 32
    $region25: #{tpu_custom_call.1} parent=1 // pred_fallthru
      _
    %2169 = vsyncpa [#allocation3], 1

</llo_original>
